<compile_context>
chip_gen: v6e
topology: v6e:2x2x1
jax: 0.10.0
libtpu: 0.0.40
codegen_flags: <defaults>
</compile_context>

<pallas_src>
import math
from functools import partial

import jax
import jax.numpy as jnp
from jax import lax
from jax.experimental import pallas as pl
from jax.experimental.pallas import tpu as pltpu


def _mha_kernel(xq_ref, rep_ref,
                wq_ref, bq_ref, wkv_ref, bkv_ref, wo_ref, bo_ref,
                out_ref, wgt_ref,
                *, num_head, d_k, d_v, dim_key):
    tb, lq, din = xq_ref.shape
    _, lr, dr = rep_ref.shape
    dout = wo_ref.shape[1]

    # MXU operands stay bf16 when inputs are bf16 (v6e/v7x); f32 otherwise.
    mxu_dt = jnp.bfloat16 if xq_ref.dtype == jnp.bfloat16 else jnp.float32

    # ---- fused projections: one big-M matmul for Q and one for [K|V] --------
    xq2 = xq_ref[...].reshape(tb * lq, din)        # (TB*Lq, Din)
    rep2 = rep_ref[...].reshape(tb * lr, dr)       # (TB*Lr, Dr)

    q2 = jnp.dot(xq2, wq_ref[...], preferred_element_type=jnp.float32) + bq_ref[...]
    kv2 = jnp.dot(rep2, wkv_ref[...], preferred_element_type=jnp.float32) + bkv_ref[...]

    # Fold the 1/sqrt(d_k) softmax scaling into Q once (equivalent to scaling
    # the scores, but operates on the much smaller (TB*Lq, Dk) tile).
    scale = 1.0 / math.sqrt(d_k)
    q2 = q2 * scale

    q = q2.reshape(tb, lq, -1).astype(mxu_dt)      # (TB, Lq, Dk)
    kv = kv2.reshape(tb, lr, -1).astype(mxu_dt)    # (TB, Lr, Dk+Dv)
    k = kv[:, :, :dim_key]                         # (TB, Lr, Dk)
    v = kv[:, :, dim_key:]                         # (TB, Lr, Dv)

    out_acc = jnp.zeros((tb, lq, dout), jnp.float32)
    wsum = jnp.zeros((tb, lq, lr), jnp.float32)

    nt = (((2,), (2,)), ((0,), (0,)))   # batched NT: contract last dims
    nn = (((2,), (1,)), ((0,), (0,)))   # batched NN: (TB,Lq,Lr) x (TB,Lr,d_v)

    # num_head is small & static -> unrolled Python loop (LLO scheduler
    # interleaves the independent per-head MXU / EUP / VPU work).
    for h in range(num_head):
        qh = q[:, :, h * d_k:(h + 1) * d_k]        # (TB, Lq, d_k)
        kh = k[:, :, h * d_k:(h + 1) * d_k]        # (TB, Lr, d_k)
        vh = v[:, :, h * d_v:(h + 1) * d_v]        # (TB, Lr, d_v)

        # NT dot_general: MXU directly, no explicit transpose of kh.
        s = lax.dot_general(qh, kh, dimension_numbers=nt,
                            preferred_element_type=jnp.float32)          # (TB,Lq,Lr)
        # TODO(synk): optional `mask` argument (masked_fill -1e9) not wired in;
        # this matches the mask=None / eval (no-dropout) path of the module.
        s = s - jnp.max(s, axis=-1, keepdims=True)
        e = jnp.exp(s)                                                    # EUP slot
        # Exact reciprocal: the mean attention weight is a kernel output that
        # must match the reference to 1e-5 (approx=True would relax that).
        w = e * pl.reciprocal(jnp.sum(e, axis=-1, keepdims=True), approx=False)
        wsum = wsum + w

        wv_h = lax.dot_general(w.astype(mxu_dt), vh, dimension_numbers=nn,
                               preferred_element_type=jnp.float32)        # (TB,Lq,d_v)

        # Fold the head output straight into the output projection -> no concat.
        wo_h = wo_ref[pl.ds(h * d_v, d_v), :]                             # (d_v, Dout)
        out_acc = out_acc + lax.dot_general(
            wv_h.astype(wo_h.dtype), wo_h,
            dimension_numbers=(((2,), (0,)), ((), ())),
            preferred_element_type=jnp.float32)                           # (TB,Lq,Dout)

    out_ref[...] = (out_acc + bo_ref[...]).astype(out_ref.dtype)
    # Single full-block store of the mean attention weights.
    # TODO(synk): when Lr < 128 this store is a masked partial store; for
    # production shapes pad/tile so the wgt block's last dim is >= 128.
    wgt_ref[...] = (wsum * (1.0 / num_head)).astype(wgt_ref.dtype)


def multi_head_attention(mismatch_query, reply, params, *, num_head, batch_block=None):
    """Pallas MHA forward. Returns (out [B,Lq,out_ch], weight [B,Lq,Lr])."""
    B, Lq, Din = mismatch_query.shape
    _, Lr, Dr = reply.shape
    wq, bq, wk, bk, wv, bv, wo, bo = params
    Dk = wq.shape[1]
    Dv = wv.shape[1]
    Dout = wo.shape[1]
    d_k = Dk // num_head
    d_v = Dv // num_head

    # Fuse K and V projections: one [Dr, Dk+Dv] weight, one matmul on `reply`.
    wkv = jnp.concatenate([wk, wv], axis=1)        # (Dr, Dk+Dv)
    bkv = jnp.concatenate([bk, bv], axis=1)        # (1,  Dk+Dv)

    # Batch-block size: aim for ~256 rows of work per grid step (fills the MXU
    # M dimension, amortizes per-step overhead); must divide B.
    if batch_block is None:
        target = max(1, 256 // max(Lq, Lr, 1))
        TB = 1
        for cand in range(1, min(B, target) + 1):
            if B % cand == 0:
                TB = cand
    else:
        TB = batch_block
    assert B % TB == 0, "batch_block must divide the batch size"

    kernel = partial(_mha_kernel, num_head=num_head, d_k=d_k, d_v=d_v, dim_key=Dk)
    full = lambda shp: pl.BlockSpec(shp, lambda b: (0,) * len(shp))

    out, wgt = pl.pallas_call(
        kernel,
        out_shape=(
            jax.ShapeDtypeStruct((B, Lq, Dout), mismatch_query.dtype),
            jax.ShapeDtypeStruct((B, Lq, Lr), jnp.float32),
        ),
        grid_spec=pltpu.PrefetchScalarGridSpec(
            num_scalar_prefetch=0,
            grid=(B // TB,),
            in_specs=[
                pl.BlockSpec((TB, Lq, Din), lambda b: (b, 0, 0)),
                pl.BlockSpec((TB, Lr, Dr), lambda b: (b, 0, 0)),
                full((Din, Dk)), full((1, Dk)),
                full((Dr, Dk + Dv)), full((1, Dk + Dv)),
                full((Dv, Dout)), full((1, Dout)),
            ],
            out_specs=[
                pl.BlockSpec((TB, Lq, Dout), lambda b: (b, 0, 0)),
                pl.BlockSpec((TB, Lq, Lr), lambda b: (b, 0, 0)),
            ],
        ),
        # TODO(synk): for production Lq/Lr (e.g. 2048) add an Lq-tile grid axis
        # with flash-style Lr streaming and set vmem_limit_bytes so the f32
        # score / wgt working set fits v7x's 64 MiB VMEM.
        compiler_params=pltpu.CompilerParams(
            dimension_semantics=("parallel",)),
    )(mismatch_query, reply, wq, bq, wkv, bkv, wo, bo)
    return out, wgt


def _reference(mismatch_query, reply, params, *, num_head):
    """Pure-JAX reference mirroring the PyTorch forward (mask=None, no dropout)."""
    wq, bq, wk, bk, wv, bv, wo, bo = params
    B, Lq, _ = mismatch_query.shape
    _, Lr, _ = reply.shape
    Dk = wq.shape[1]
    Dv = wv.shape[1]
    d_k = Dk // num_head
    d_v = Dv // num_head

    q = mismatch_query @ wq + bq
    k = reply @ wk + bk
    v = reply @ wv + bv
    q = q.reshape(B, Lq, num_head, d_k).transpose(0, 2, 1, 3)
    k = k.reshape(B, Lr, num_head, d_k).transpose(0, 2, 1, 3)
    v = v.reshape(B, Lr, num_head, d_v).transpose(0, 2, 1, 3)
    s = jnp.einsum("bhqd,bhkd->bhqk", q, k) / math.sqrt(d_k)
    w = jax.nn.softmax(s, axis=-1)
    wv_out = jnp.einsum("bhqk,bhkd->bhqd", w, v)
    wv_out = wv_out.transpose(0, 2, 1, 3).reshape(B, Lq, Dv)
    out = wv_out @ wo + bo
    return out, jnp.mean(w, axis=1)


def init_params(key, in_channels, out_channels, dim_reply, dim_key, dim_value):
    ks = jax.random.split(key, 8)
    def lin(kw, kb, fan_in, fan_out):
        bound = 1.0 / math.sqrt(fan_in)
        w = jax.random.uniform(kw, (fan_in, fan_out), jnp.float32, -bound, bound)
        b = jax.random.uniform(kb, (1, fan_out), jnp.float32, -bound, bound)
        return w, b
    wq, bq = lin(ks[0], ks[1], in_channels, dim_key)
    wk, bk = lin(ks[2], ks[3], dim_reply, dim_key)
    wv, bv = lin(ks[4], ks[5], dim_reply, dim_value)
    wo, bo = lin(ks[6], ks[7], dim_value, out_channels)
    return (wq, bq, wk, bk, wv, bv, wo, bo)


if __name__ == "__main__":
    # small, deterministic test shapes
    B, Lq, Lr = 2, 8, 8
    in_channels, dim_reply = 32, 32
    dim_key, dim_value, out_channels = 32, 32, 32
    num_head = 4

    key = jax.random.PRNGKey(0)
    k1, k2, k3 = jax.random.split(key, 3)
    mismatch_query = jax.random.normal(k1, (B, Lq, in_channels), jnp.float32)
    reply = jax.random.normal(k2, (B, Lr, dim_reply), jnp.float32)
    params = init_params(k3, in_channels, out_channels, dim_reply, dim_key, dim_value)

    out, wgt = multi_head_attention(mismatch_query, reply, params, num_head=num_head)
    out = jax.block_until_ready(out)
    wgt = jax.block_until_ready(wgt)

    ref_out, ref_wgt = _reference(mismatch_query, reply, params, num_head=num_head)
    assert jnp.allclose(out, ref_out, atol=1e-4, rtol=1e-4), "output mismatch"
    assert jnp.allclose(wgt, ref_wgt, atol=1e-5, rtol=1e-5), "attention-weight mismatch"

    print("KERNEL_OK")
</pallas_src>

<mosaic_0001>
module attributes {stable_mosaic.version = 11 : i64} {
  func.func @_mha_kernel(%arg0: i32, %arg1: memref<2x8x32xf32, #tpu.memory_space<vmem>>, %arg2: memref<2x8x32xf32, #tpu.memory_space<vmem>>, %arg3: memref<32x32xf32, #tpu.memory_space<vmem>>, %arg4: memref<1x32xf32, #tpu.memory_space<vmem>>, %arg5: memref<32x64xf32, #tpu.memory_space<vmem>>, %arg6: memref<1x64xf32, #tpu.memory_space<vmem>>, %arg7: memref<32x32xf32, #tpu.memory_space<vmem>>, %arg8: memref<1x32xf32, #tpu.memory_space<vmem>>, %arg9: memref<2x8x32xf32, #tpu.memory_space<vmem>>, %arg10: memref<2x8x8xf32, #tpu.memory_space<vmem>>) attributes {dimension_semantics = [#tpu.dimension_semantics<parallel>], iteration_bounds = array<i64: 1>, scalar_prefetch = 0 : i64, scratch_operands = 0 : i64, tpu.core_type = #tpu.core_type<tc>, window_params = [{transform_indices = @transform_0, window_bounds = array<i64: 2, 8, 32>}, {transform_indices = @transform_1, window_bounds = array<i64: 2, 8, 32>}, {pipeline_mode = #tpu.pipeline_mode<synchronous>, transform_indices = @transform_2, window_bounds = array<i64: 32, 32>}, {pipeline_mode = #tpu.pipeline_mode<synchronous>, transform_indices = @transform_3, window_bounds = array<i64: 1, 32>}, {pipeline_mode = #tpu.pipeline_mode<synchronous>, transform_indices = @transform_4, window_bounds = array<i64: 32, 64>}, {pipeline_mode = #tpu.pipeline_mode<synchronous>, transform_indices = @transform_5, window_bounds = array<i64: 1, 64>}, {pipeline_mode = #tpu.pipeline_mode<synchronous>, transform_indices = @transform_6, window_bounds = array<i64: 32, 32>}, {pipeline_mode = #tpu.pipeline_mode<synchronous>, transform_indices = @transform_7, window_bounds = array<i64: 1, 32>}, {transform_indices = @transform_8, window_bounds = array<i64: 2, 8, 32>}, {transform_indices = @transform_9, window_bounds = array<i64: 2, 8, 8>}]} {
    %c0 = arith.constant 0 : index
    %c0_0 = arith.constant 0 : index
    %c0_1 = arith.constant 0 : index
    %0 = vector.load %arg1[%c0, %c0_0, %c0_1] : memref<2x8x32xf32, #tpu.memory_space<vmem>>, vector<2x8x32xf32>
    %1 = vector.shape_cast %0 : vector<2x8x32xf32> to vector<16x32xf32>
    %c0_2 = arith.constant 0 : index
    %c0_3 = arith.constant 0 : index
    %c0_4 = arith.constant 0 : index
    %2 = vector.load %arg2[%c0_2, %c0_3, %c0_4] : memref<2x8x32xf32, #tpu.memory_space<vmem>>, vector<2x8x32xf32>
    %3 = vector.shape_cast %2 : vector<2x8x32xf32> to vector<16x32xf32>
    %c0_5 = arith.constant 0 : index
    %c0_6 = arith.constant 0 : index
    %4 = vector.load %arg3[%c0_5, %c0_6] : memref<32x32xf32, #tpu.memory_space<vmem>>, vector<32x32xf32>
    %cst = arith.constant dense<0.000000e+00> : vector<16x32xf32>
    %5 = tpu.matmul %1, %4, %cst {dimension_numbers = #tpu.dot_dimension_numbers<[1], [0], [0], [1], [0, 0, 1, 1], [], []>} : vector<16x32xf32>, vector<32x32xf32>, vector<16x32xf32> -> vector<16x32xf32>
    %c0_7 = arith.constant 0 : index
    %c0_8 = arith.constant 0 : index
    %6 = vector.load %arg4[%c0_7, %c0_8] : memref<1x32xf32, #tpu.memory_space<vmem>>, vector<1x32xf32>
    %7 = vector.broadcast %6 : vector<1x32xf32> to vector<16x32xf32>
    %8 = arith.addf %5, %7 : vector<16x32xf32>
    %c0_9 = arith.constant 0 : index
    %c0_10 = arith.constant 0 : index
    %9 = vector.load %arg5[%c0_9, %c0_10] : memref<32x64xf32, #tpu.memory_space<vmem>>, vector<32x64xf32>
    %cst_11 = arith.constant dense<0.000000e+00> : vector<16x64xf32>
    %10 = tpu.matmul %3, %9, %cst_11 {dimension_numbers = #tpu.dot_dimension_numbers<[1], [0], [0], [1], [0, 0, 1, 1], [], []>} : vector<16x32xf32>, vector<32x64xf32>, vector<16x64xf32> -> vector<16x64xf32>
    %c0_12 = arith.constant 0 : index
    %c0_13 = arith.constant 0 : index
    %11 = vector.load %arg6[%c0_12, %c0_13] : memref<1x64xf32, #tpu.memory_space<vmem>>, vector<1x64xf32>
    %12 = vector.broadcast %11 : vector<1x64xf32> to vector<16x64xf32>
    %13 = arith.addf %10, %12 : vector<16x64xf32>
    %cst_14 = arith.constant 0.353553385 : f32
    %14 = vector.broadcast %cst_14 : f32 to vector<16x32xf32>
    %15 = arith.mulf %8, %14 : vector<16x32xf32>
    %16 = vector.shape_cast %15 : vector<16x32xf32> to vector<2x8x32xf32>
    %17 = vector.shape_cast %13 : vector<16x64xf32> to vector<2x8x64xf32>
    %18 = vector.extract_strided_slice %17 {offsets = [0, 0, 0], sizes = [2, 8, 32], strides = [1, 1, 1]} : vector<2x8x64xf32> to vector<2x8x32xf32>
    %19 = vector.extract_strided_slice %17 {offsets = [0, 0, 32], sizes = [2, 8, 32], strides = [1, 1, 1]} : vector<2x8x64xf32> to vector<2x8x32xf32>
    %cst_15 = arith.constant 0.000000e+00 : f32
    %20 = vector.broadcast %cst_15 : f32 to vector<2x8x32xf32>
    %cst_16 = arith.constant 0.000000e+00 : f32
    %21 = vector.broadcast %cst_16 : f32 to vector<2x8x8xf32>
    %22 = vector.extract_strided_slice %16 {offsets = [0, 0, 0], sizes = [2, 8, 8], strides = [1, 1, 1]} : vector<2x8x32xf32> to vector<2x8x8xf32>
    %23 = vector.extract_strided_slice %18 {offsets = [0, 0, 0], sizes = [2, 8, 8], strides = [1, 1, 1]} : vector<2x8x32xf32> to vector<2x8x8xf32>
    %24 = vector.extract_strided_slice %19 {offsets = [0, 0, 0], sizes = [2, 8, 8], strides = [1, 1, 1]} : vector<2x8x32xf32> to vector<2x8x8xf32>
    %cst_17 = arith.constant dense<0.000000e+00> : vector<2x8x8xf32>
    %25 = tpu.matmul %22, %23, %cst_17 {dimension_numbers = #tpu.dot_dimension_numbers<[2], [2], [1], [1], [0, 0, 0, 1, 1, 1], [0], [0]>} : vector<2x8x8xf32>, vector<2x8x8xf32>, vector<2x8x8xf32> -> vector<2x8x8xf32>
    %cst_18 = arith.constant dense<0xFF800000> : vector<2x8xf32>
    %26 = vector.multi_reduction <maximumf>, %25, %cst_18 [2] : vector<2x8x8xf32> to vector<2x8xf32>
    %27 = vector.shape_cast %26 : vector<2x8xf32> to vector<2x8x1xf32>
    %28 = vector.broadcast %27 : vector<2x8x1xf32> to vector<2x8x8xf32>
    %29 = arith.subf %25, %28 : vector<2x8x8xf32>
    %30 = math.exp %29 : vector<2x8x8xf32>
    %cst_19 = arith.constant dense<0.000000e+00> : vector<2x8xf32>
    %31 = vector.multi_reduction <add>, %30, %cst_19 [2] : vector<2x8x8xf32> to vector<2x8xf32>
    %32 = vector.shape_cast %31 : vector<2x8xf32> to vector<2x8x1xf32>
    %33 = tpu.reciprocal %32 : vector<2x8x1xf32> -> vector<2x8x1xf32>
    %34 = vector.broadcast %33 : vector<2x8x1xf32> to vector<2x8x8xf32>
    %35 = arith.mulf %30, %34 : vector<2x8x8xf32>
    %36 = arith.addf %21, %35 : vector<2x8x8xf32>
    %cst_20 = arith.constant dense<0.000000e+00> : vector<2x8x8xf32>
    %37 = tpu.matmul %35, %24, %cst_20 {dimension_numbers = #tpu.dot_dimension_numbers<[2], [1], [1], [2], [0, 0, 0, 1, 1, 2], [0], [0]>} : vector<2x8x8xf32>, vector<2x8x8xf32>, vector<2x8x8xf32> -> vector<2x8x8xf32>
    %c0_21 = arith.constant 0 : index
    %c0_22 = arith.constant 0 : index
    %38 = vector.load %arg7[%c0_21, %c0_22] : memref<32x32xf32, #tpu.memory_space<vmem>>, vector<8x32xf32>
    %cst_23 = arith.constant dense<0.000000e+00> : vector<2x8x32xf32>
    %39 = tpu.matmul %37, %38, %cst_23 {dimension_numbers = #tpu.dot_dimension_numbers<[2], [0], [0, 1], [1], [0, 0, 0, 1, 1, 1], [], []>} : vector<2x8x8xf32>, vector<8x32xf32>, vector<2x8x32xf32> -> vector<2x8x32xf32>
    %40 = arith.addf %20, %39 : vector<2x8x32xf32>
    %41 = vector.extract_strided_slice %16 {offsets = [0, 0, 8], sizes = [2, 8, 8], strides = [1, 1, 1]} : vector<2x8x32xf32> to vector<2x8x8xf32>
    %42 = vector.extract_strided_slice %18 {offsets = [0, 0, 8], sizes = [2, 8, 8], strides = [1, 1, 1]} : vector<2x8x32xf32> to vector<2x8x8xf32>
    %43 = vector.extract_strided_slice %19 {offsets = [0, 0, 8], sizes = [2, 8, 8], strides = [1, 1, 1]} : vector<2x8x32xf32> to vector<2x8x8xf32>
    %cst_24 = arith.constant dense<0.000000e+00> : vector<2x8x8xf32>
    %44 = tpu.matmul %41, %42, %cst_24 {dimension_numbers = #tpu.dot_dimension_numbers<[2], [2], [1], [1], [0, 0, 0, 1, 1, 1], [0], [0]>} : vector<2x8x8xf32>, vector<2x8x8xf32>, vector<2x8x8xf32> -> vector<2x8x8xf32>
    %cst_25 = arith.constant dense<0xFF800000> : vector<2x8xf32>
    %45 = vector.multi_reduction <maximumf>, %44, %cst_25 [2] : vector<2x8x8xf32> to vector<2x8xf32>
    %46 = vector.shape_cast %45 : vector<2x8xf32> to vector<2x8x1xf32>
    %47 = vector.broadcast %46 : vector<2x8x1xf32> to vector<2x8x8xf32>
    %48 = arith.subf %44, %47 : vector<2x8x8xf32>
    %49 = math.exp %48 : vector<2x8x8xf32>
    %cst_26 = arith.constant dense<0.000000e+00> : vector<2x8xf32>
    %50 = vector.multi_reduction <add>, %49, %cst_26 [2] : vector<2x8x8xf32> to vector<2x8xf32>
    %51 = vector.shape_cast %50 : vector<2x8xf32> to vector<2x8x1xf32>
    %52 = tpu.reciprocal %51 : vector<2x8x1xf32> -> vector<2x8x1xf32>
    %53 = vector.broadcast %52 : vector<2x8x1xf32> to vector<2x8x8xf32>
    %54 = arith.mulf %49, %53 : vector<2x8x8xf32>
    %55 = arith.addf %36, %54 : vector<2x8x8xf32>
    %cst_27 = arith.constant dense<0.000000e+00> : vector<2x8x8xf32>
    %56 = tpu.matmul %54, %43, %cst_27 {dimension_numbers = #tpu.dot_dimension_numbers<[2], [1], [1], [2], [0, 0, 0, 1, 1, 2], [0], [0]>} : vector<2x8x8xf32>, vector<2x8x8xf32>, vector<2x8x8xf32> -> vector<2x8x8xf32>
    %c8 = arith.constant 8 : index
    %c0_28 = arith.constant 0 : index
    %57 = vector.load %arg7[%c8, %c0_28] : memref<32x32xf32, #tpu.memory_space<vmem>>, vector<8x32xf32>
    %cst_29 = arith.constant dense<0.000000e+00> : vector<2x8x32xf32>
    %58 = tpu.matmul %56, %57, %cst_29 {dimension_numbers = #tpu.dot_dimension_numbers<[2], [0], [0, 1], [1], [0, 0, 0, 1, 1, 1], [], []>} : vector<2x8x8xf32>, vector<8x32xf32>, vector<2x8x32xf32> -> vector<2x8x32xf32>
    %59 = arith.addf %40, %58 : vector<2x8x32xf32>
    %60 = vector.extract_strided_slice %16 {offsets = [0, 0, 16], sizes = [2, 8, 8], strides = [1, 1, 1]} : vector<2x8x32xf32> to vector<2x8x8xf32>
    %61 = vector.extract_strided_slice %18 {offsets = [0, 0, 16], sizes = [2, 8, 8], strides = [1, 1, 1]} : vector<2x8x32xf32> to vector<2x8x8xf32>
    %62 = vector.extract_strided_slice %19 {offsets = [0, 0, 16], sizes = [2, 8, 8], strides = [1, 1, 1]} : vector<2x8x32xf32> to vector<2x8x8xf32>
    %cst_30 = arith.constant dense<0.000000e+00> : vector<2x8x8xf32>
    %63 = tpu.matmul %60, %61, %cst_30 {dimension_numbers = #tpu.dot_dimension_numbers<[2], [2], [1], [1], [0, 0, 0, 1, 1, 1], [0], [0]>} : vector<2x8x8xf32>, vector<2x8x8xf32>, vector<2x8x8xf32> -> vector<2x8x8xf32>
    %cst_31 = arith.constant dense<0xFF800000> : vector<2x8xf32>
    %64 = vector.multi_reduction <maximumf>, %63, %cst_31 [2] : vector<2x8x8xf32> to vector<2x8xf32>
    %65 = vector.shape_cast %64 : vector<2x8xf32> to vector<2x8x1xf32>
    %66 = vector.broadcast %65 : vector<2x8x1xf32> to vector<2x8x8xf32>
    %67 = arith.subf %63, %66 : vector<2x8x8xf32>
    %68 = math.exp %67 : vector<2x8x8xf32>
    %cst_32 = arith.constant dense<0.000000e+00> : vector<2x8xf32>
    %69 = vector.multi_reduction <add>, %68, %cst_32 [2] : vector<2x8x8xf32> to vector<2x8xf32>
    %70 = vector.shape_cast %69 : vector<2x8xf32> to vector<2x8x1xf32>
    %71 = tpu.reciprocal %70 : vector<2x8x1xf32> -> vector<2x8x1xf32>
    %72 = vector.broadcast %71 : vector<2x8x1xf32> to vector<2x8x8xf32>
    %73 = arith.mulf %68, %72 : vector<2x8x8xf32>
    %74 = arith.addf %55, %73 : vector<2x8x8xf32>
    %cst_33 = arith.constant dense<0.000000e+00> : vector<2x8x8xf32>
    %75 = tpu.matmul %73, %62, %cst_33 {dimension_numbers = #tpu.dot_dimension_numbers<[2], [1], [1], [2], [0, 0, 0, 1, 1, 2], [0], [0]>} : vector<2x8x8xf32>, vector<2x8x8xf32>, vector<2x8x8xf32> -> vector<2x8x8xf32>
    %c16 = arith.constant 16 : index
    %c0_34 = arith.constant 0 : index
    %76 = vector.load %arg7[%c16, %c0_34] : memref<32x32xf32, #tpu.memory_space<vmem>>, vector<8x32xf32>
    %cst_35 = arith.constant dense<0.000000e+00> : vector<2x8x32xf32>
    %77 = tpu.matmul %75, %76, %cst_35 {dimension_numbers = #tpu.dot_dimension_numbers<[2], [0], [0, 1], [1], [0, 0, 0, 1, 1, 1], [], []>} : vector<2x8x8xf32>, vector<8x32xf32>, vector<2x8x32xf32> -> vector<2x8x32xf32>
    %78 = arith.addf %59, %77 : vector<2x8x32xf32>
    %79 = vector.extract_strided_slice %16 {offsets = [0, 0, 24], sizes = [2, 8, 8], strides = [1, 1, 1]} : vector<2x8x32xf32> to vector<2x8x8xf32>
    %80 = vector.extract_strided_slice %18 {offsets = [0, 0, 24], sizes = [2, 8, 8], strides = [1, 1, 1]} : vector<2x8x32xf32> to vector<2x8x8xf32>
    %81 = vector.extract_strided_slice %19 {offsets = [0, 0, 24], sizes = [2, 8, 8], strides = [1, 1, 1]} : vector<2x8x32xf32> to vector<2x8x8xf32>
    %cst_36 = arith.constant dense<0.000000e+00> : vector<2x8x8xf32>
    %82 = tpu.matmul %79, %80, %cst_36 {dimension_numbers = #tpu.dot_dimension_numbers<[2], [2], [1], [1], [0, 0, 0, 1, 1, 1], [0], [0]>} : vector<2x8x8xf32>, vector<2x8x8xf32>, vector<2x8x8xf32> -> vector<2x8x8xf32>
    %cst_37 = arith.constant dense<0xFF800000> : vector<2x8xf32>
    %83 = vector.multi_reduction <maximumf>, %82, %cst_37 [2] : vector<2x8x8xf32> to vector<2x8xf32>
    %84 = vector.shape_cast %83 : vector<2x8xf32> to vector<2x8x1xf32>
    %85 = vector.broadcast %84 : vector<2x8x1xf32> to vector<2x8x8xf32>
    %86 = arith.subf %82, %85 : vector<2x8x8xf32>
    %87 = math.exp %86 : vector<2x8x8xf32>
    %cst_38 = arith.constant dense<0.000000e+00> : vector<2x8xf32>
    %88 = vector.multi_reduction <add>, %87, %cst_38 [2] : vector<2x8x8xf32> to vector<2x8xf32>
    %89 = vector.shape_cast %88 : vector<2x8xf32> to vector<2x8x1xf32>
    %90 = tpu.reciprocal %89 : vector<2x8x1xf32> -> vector<2x8x1xf32>
    %91 = vector.broadcast %90 : vector<2x8x1xf32> to vector<2x8x8xf32>
    %92 = arith.mulf %87, %91 : vector<2x8x8xf32>
    %93 = arith.addf %74, %92 : vector<2x8x8xf32>
    %cst_39 = arith.constant dense<0.000000e+00> : vector<2x8x8xf32>
    %94 = tpu.matmul %92, %81, %cst_39 {dimension_numbers = #tpu.dot_dimension_numbers<[2], [1], [1], [2], [0, 0, 0, 1, 1, 2], [0], [0]>} : vector<2x8x8xf32>, vector<2x8x8xf32>, vector<2x8x8xf32> -> vector<2x8x8xf32>
    %c24 = arith.constant 24 : index
    %c0_40 = arith.constant 0 : index
    %95 = vector.load %arg7[%c24, %c0_40] : memref<32x32xf32, #tpu.memory_space<vmem>>, vector<8x32xf32>
    %cst_41 = arith.constant dense<0.000000e+00> : vector<2x8x32xf32>
    %96 = tpu.matmul %94, %95, %cst_41 {dimension_numbers = #tpu.dot_dimension_numbers<[2], [0], [0, 1], [1], [0, 0, 0, 1, 1, 1], [], []>} : vector<2x8x8xf32>, vector<8x32xf32>, vector<2x8x32xf32> -> vector<2x8x32xf32>
    %97 = arith.addf %78, %96 : vector<2x8x32xf32>
    %c0_42 = arith.constant 0 : index
    %c0_43 = arith.constant 0 : index
    %98 = vector.load %arg8[%c0_42, %c0_43] : memref<1x32xf32, #tpu.memory_space<vmem>>, vector<1x32xf32>
    %99 = vector.shape_cast %98 : vector<1x32xf32> to vector<1x1x32xf32>
    %100 = vector.broadcast %99 : vector<1x1x32xf32> to vector<2x8x32xf32>
    %101 = arith.addf %97, %100 : vector<2x8x32xf32>
    %c0_44 = arith.constant 0 : index
    %c0_45 = arith.constant 0 : index
    %c0_46 = arith.constant 0 : index
    %102 = vector.load %arg9[%c0_44, %c0_45, %c0_46] : memref<2x8x32xf32, #tpu.memory_space<vmem>>, vector<2x8x32xf32>
    tpu.vector_store %arg9[%c0_44, %c0_45, %c0_46], %101 {strides = array<i32>} : memref<2x8x32xf32, #tpu.memory_space<vmem>>, vector<2x8x32xf32>,
    %cst_47 = arith.constant 2.500000e-01 : f32
    %103 = vector.broadcast %cst_47 : f32 to vector<2x8x8xf32>
    %104 = arith.mulf %93, %103 : vector<2x8x8xf32>
    %c0_48 = arith.constant 0 : index
    %c0_49 = arith.constant 0 : index
    %c0_50 = arith.constant 0 : index
    %105 = vector.load %arg10[%c0_48, %c0_49, %c0_50] : memref<2x8x8xf32, #tpu.memory_space<vmem>>, vector<2x8x8xf32>
    tpu.vector_store %arg10[%c0_48, %c0_49, %c0_50], %104 {strides = array<i32>} : memref<2x8x8xf32, #tpu.memory_space<vmem>>, vector<2x8x8xf32>,
    return
  }
  func.func @transform_0(%arg0: i32) -> (i32, i32, i32) {
    %c0_i32 = arith.constant 0 : i32
    %c0_i32_0 = arith.constant 0 : i32
    %c0_i32_1 = arith.constant 0 : i32
    return %arg0, %c0_i32, %c0_i32_0 : i32, i32, i32
  }
  func.func @transform_1(%arg0: i32) -> (i32, i32, i32) {
    %c0_i32 = arith.constant 0 : i32
    %c0_i32_0 = arith.constant 0 : i32
    %c0_i32_1 = arith.constant 0 : i32
    return %arg0, %c0_i32, %c0_i32_0 : i32, i32, i32
  }
  func.func @transform_2(%arg0: i32) -> (i32, i32) {
    %c0_i32 = arith.constant 0 : i32
    %c0_i32_0 = arith.constant 0 : i32
    %c0_i32_1 = arith.constant 0 : i32
    return %c0_i32, %c0_i32_0 : i32, i32
  }
  func.func @transform_3(%arg0: i32) -> (i32, i32) {
    %c0_i32 = arith.constant 0 : i32
    %c0_i32_0 = arith.constant 0 : i32
    %c0_i32_1 = arith.constant 0 : i32
    return %c0_i32, %c0_i32_0 : i32, i32
  }
  func.func @transform_4(%arg0: i32) -> (i32, i32) {
    %c0_i32 = arith.constant 0 : i32
    %c0_i32_0 = arith.constant 0 : i32
    %c0_i32_1 = arith.constant 0 : i32
    return %c0_i32, %c0_i32_0 : i32, i32
  }
  func.func @transform_5(%arg0: i32) -> (i32, i32) {
    %c0_i32 = arith.constant 0 : i32
    %c0_i32_0 = arith.constant 0 : i32
    %c0_i32_1 = arith.constant 0 : i32
    return %c0_i32, %c0_i32_0 : i32, i32
  }
  func.func @transform_6(%arg0: i32) -> (i32, i32) {
    %c0_i32 = arith.constant 0 : i32
    %c0_i32_0 = arith.constant 0 : i32
    %c0_i32_1 = arith.constant 0 : i32
    return %c0_i32, %c0_i32_0 : i32, i32
  }
  func.func @transform_7(%arg0: i32) -> (i32, i32) {
    %c0_i32 = arith.constant 0 : i32
    %c0_i32_0 = arith.constant 0 : i32
    %c0_i32_1 = arith.constant 0 : i32
    return %c0_i32, %c0_i32_0 : i32, i32
  }
  func.func @transform_8(%arg0: i32) -> (i32, i32, i32) {
    %c0_i32 = arith.constant 0 : i32
    %c0_i32_0 = arith.constant 0 : i32
    %c0_i32_1 = arith.constant 0 : i32
    return %arg0, %c0_i32, %c0_i32_0 : i32, i32, i32
  }
  func.func @transform_9(%arg0: i32) -> (i32, i32, i32) {
    %c0_i32 = arith.constant 0 : i32
    %c0_i32_0 = arith.constant 0 : i32
    %c0_i32_1 = arith.constant 0 : i32
    return %arg0, %c0_i32, %c0_i32_0 : i32, i32, i32
  }
}

</mosaic_0001>

<llo_original>
// kernel: tpu_custom_call.1
$region0: #{tpu_custom_call.1}
  #allocation0 [shape = 'u32[]', space=smem, size = 0x4, offset = 0x4, fixed_abs, tag = 'smem constant byte address 0x4 - core index']
  #allocation1 [shape = 'u32[144,128]{1,0:T(1,128)}', space=vmem, size = 0x12000, scoped, tag = 'internal scratch']
  %s0 = inlined_call_operand.hbm [shape: f32[2,8,32], index: 0, kind: input, shape index: {}]
  %s1 = inlined_call_operand.hbm [shape: f32[2,8,32], index: 1, kind: input, shape index: {}]
  %s2 = inlined_call_operand.hbm [shape: f32[32,32], index: 2, kind: input, shape index: {}]
  %s3 = inlined_call_operand.vmem [shape: f32[1,32], index: 3, kind: input, shape index: {}]
  %s4 = inlined_call_operand.hbm [shape: f32[32,64], index: 4, kind: input, shape index: {}]
  %s5 = inlined_call_operand.vmem [shape: f32[1,64], index: 5, kind: input, shape index: {}]
  %s6 = inlined_call_operand.hbm [shape: f32[32,32], index: 6, kind: input, shape index: {}]
  %s7 = inlined_call_operand.vmem [shape: f32[1,32], index: 7, kind: input, shape index: {}]
  %s8 = inlined_call_operand.hbm [shape: f32[2,8,32], index: 8, kind: output, shape index: {0}]
  %s9 = inlined_call_operand.hbm [shape: f32[2,8,8], index: 9, kind: output, shape index: {1}]
  %10 = xla_tuple %s8, %s9
  %s11 = sld [smem:[#allocation0]]
  $region70: #{tpu_custom_call.1} parent=0
    _
  %s13 = ssub.s32 1, %s11
  %s14 = scalar_select 0, %s13, %s11
  $region1: #{tpu_custom_call.1} parent=0
    #allocation2 [shape = 'u8[8192]{0}', space=vmem, size = 0x2000, scoped, tag = 'input window, operand 0, single buffered']
    #allocation3 [shape = 's32[1]{0}', space=sflag, size = 0x4, scoped, tag = 'scoped memory for tpu_custom_call.1']
    #allocation4 [shape = 's32[1]{0}', space=sflag, size = 0x4, scoped, tag = 'scoped memory for tpu_custom_call.1']
    #allocation5 [shape = 'u8[8192]{0}', space=vmem, size = 0x2000, scoped, tag = 'input window, operand 1, single buffered']
    #allocation6 [shape = 's32[1]{0}', space=sflag, size = 0x4, scoped, tag = 'scoped memory for tpu_custom_call.1']
    #allocation7 [shape = 'u8[16384]{0}', space=vmem, size = 0x4000, scoped, tag = 'input window, operand 2, single buffered']
    #allocation8 [shape = 'u8[16384]{0}', space=vmem, size = 0x4000, scoped, tag = 'input window, operand 4, single buffered']
    #allocation9 [shape = 's32[1]{0}', space=sflag, size = 0x4, scoped, tag = 'scoped memory for tpu_custom_call.1']
    #allocation10 [shape = 'u8[16384]{0}', space=vmem, size = 0x4000, scoped, tag = 'input window, operand 6, single buffered']
    #allocation11 [shape = 'u8[8192]{0}', space=vmem, size = 0x2000, scoped, tag = 'output window, operand 0, single buffered']
    #allocation12 [shape = 'u8[8192]{0}', space=vmem, size = 0x2000, scoped, tag = 'output window, operand 1, single buffered']
    #allocation13 [shape = 's32[1]{0}', space=sflag, size = 0x4, scoped, tag = 'scoped memory for tpu_custom_call.1']
    %15 = vsyncpa [#allocation3], 0
    %16 = vsyncpa [#allocation6], 0
    %17 = vsyncpa [#allocation9], 0
    %18 = vsyncpa [#allocation4], 0
    %19 = vsyncpa [#allocation13], 0
    // Predicated region
    $region2: #{tpu_custom_call.1} parent=1 // pred_check
      _
    $region3: #{tpu_custom_call.1} parent=1 // pred_check_branch
      %21 = sbr.rel (0) target = $region5
    $region4: #{tpu_custom_call.1} parent=1 // pred_region
      %s23 = ssub.s32 256, 256
      %24 = vsyncadd [#allocation3], %s23
      %s25 = sshll.u32 [#allocation2], 4
      %s26 = int_to_ptr.vmem [resolvable:$true] %s25
      %31 = dma.hbm_to_vmem [thread:$0]  %s0, 256, %s26, [#allocation3], 128, 128, 8
    $region5: #{tpu_custom_call.1} parent=1 // pred_fallthru
      _
    // Predicated region
    $region6: #{tpu_custom_call.1} parent=1 // pred_check
      _
    $region7: #{tpu_custom_call.1} parent=1 // pred_check_branch
      %33 = sbr.rel (0) target = $region9
    $region8: #{tpu_custom_call.1} parent=1 // pred_region
      %s35 = ssub.s32 256, 256
      %36 = vsyncadd [#allocation6], %s35
      %s37 = sshll.u32 [#allocation5], 4
      %s38 = int_to_ptr.vmem [resolvable:$true] %s37
      %43 = dma.hbm_to_vmem [thread:$0]  %s1, 256, %s38, [#allocation6], 128, 128, 8
    $region9: #{tpu_custom_call.1} parent=1 // pred_fallthru
      _
    // Predicated region
    $region10: #{tpu_custom_call.1} parent=1 // pred_check
      _
    $region11: #{tpu_custom_call.1} parent=1 // pred_check_branch
      %45 = sbr.rel (0) target = $region13
    $region12: #{tpu_custom_call.1} parent=1 // pred_region
      %s47 = ssub.s32 512, 512
      %48 = vsyncadd [#allocation6], %s47
      %s49 = sshll.u32 [#allocation7], 4
      %s50 = int_to_ptr.vmem [resolvable:$true] %s49
      %55 = dma.hbm_to_vmem [thread:$0]  %s2, 512, %s50, [#allocation6], 128, 128, 8
    $region13: #{tpu_custom_call.1} parent=1 // pred_fallthru
      _
    // Predicated region
    $region14: #{tpu_custom_call.1} parent=1 // pred_check
      _
    $region15: #{tpu_custom_call.1} parent=1 // pred_check_branch
      %57 = sbr.rel (0) target = $region17
    $region16: #{tpu_custom_call.1} parent=1 // pred_region
      _
    $region17: #{tpu_custom_call.1} parent=1 // pred_fallthru
      _
    // Predicated region
    $region18: #{tpu_custom_call.1} parent=1 // pred_check
      _
    $region19: #{tpu_custom_call.1} parent=1 // pred_check_branch
      %59 = sbr.rel (0) target = $region21
    $region20: #{tpu_custom_call.1} parent=1 // pred_region
      %s61 = ssub.s32 512, 512
      %62 = vsyncadd [#allocation9], %s61
      %s63 = sshll.u32 [#allocation8], 4
      %s64 = int_to_ptr.vmem [resolvable:$true] %s63
      %69 = dma.hbm_to_vmem [thread:$0]  %s4, 512, %s64, [#allocation9], 128, 128, 8
    $region21: #{tpu_custom_call.1} parent=1 // pred_fallthru
      _
    // Predicated region
    $region22: #{tpu_custom_call.1} parent=1 // pred_check
      _
    $region23: #{tpu_custom_call.1} parent=1 // pred_check_branch
      %71 = sbr.rel (0) target = $region25
    $region24: #{tpu_custom_call.1} parent=1 // pred_region
      _
    $region25: #{tpu_custom_call.1} parent=1 // pred_fallthru
      _
    // Predicated region
    $region26: #{tpu_custom_call.1} parent=1 // pred_check
      _
    $region27: #{tpu_custom_call.1} parent=1 // pred_check_branch
      %73 = sbr.rel (0) target = $region29
    $region28: #{tpu_custom_call.1} parent=1 // pred_region
      %s75 = ssub.s32 512, 512
      %76 = vsyncadd [#allocation9], %s75
      %s77 = sshll.u32 [#allocation10], 4
      %s78 = int_to_ptr.vmem [resolvable:$true] %s77
      %83 = dma.hbm_to_vmem [thread:$0]  %s6, 512, %s78, [#allocation9], 128, 128, 8
    $region29: #{tpu_custom_call.1} parent=1 // pred_fallthru
      _
    // Predicated region
    $region30: #{tpu_custom_call.1} parent=1 // pred_check
      _
    $region31: #{tpu_custom_call.1} parent=1 // pred_check_branch
      %85 = sbr.rel (0) target = $region33
    $region32: #{tpu_custom_call.1} parent=1 // pred_region
      _
    $region33: #{tpu_custom_call.1} parent=1 // pred_fallthru
      _
    // Predicated region
    $region34: #{tpu_custom_call.1} parent=1 // pred_check
      _
    $region35: #{tpu_custom_call.1} parent=1 // pred_check_branch
      %87 = sbr.rel (0) target = $region37
    $region36: #{tpu_custom_call.1} parent=1 // pred_region
      %88 = dma.done [#allocation3], 256
    $region37: #{tpu_custom_call.1} parent=1 // pred_fallthru
      _
    // Predicated region
    $region38: #{tpu_custom_call.1} parent=1 // pred_check
      _
    $region39: #{tpu_custom_call.1} parent=1 // pred_check_branch
      %90 = sbr.rel (0) target = $region41
    $region40: #{tpu_custom_call.1} parent=1 // pred_region
      %91 = dma.done [#allocation6], 256
    $region41: #{tpu_custom_call.1} parent=1 // pred_fallthru
      _
    // Predicated region
    $region42: #{tpu_custom_call.1} parent=1 // pred_check
      _
    $region43: #{tpu_custom_call.1} parent=1 // pred_check_branch
      %93 = sbr.rel (0) target = $region45
    $region44: #{tpu_custom_call.1} parent=1 // pred_region
      %94 = dma.done [#allocation6], 512
    $region45: #{tpu_custom_call.1} parent=1 // pred_fallthru
      _
    // Predicated region
    $region46: #{tpu_custom_call.1} parent=1 // pred_check
      _
    $region47: #{tpu_custom_call.1} parent=1 // pred_check_branch
      %96 = sbr.rel (0) target = $region49
    $region48: #{tpu_custom_call.1} parent=1 // pred_region
      %97 = dma.done [#allocation9], 512
    $region49: #{tpu_custom_call.1} parent=1 // pred_fallthru
      _
    // Predicated region
    $region50: #{tpu_custom_call.1} parent=1 // pred_check
      _
    $region51: #{tpu_custom_call.1} parent=1 // pred_check_branch
      %99 = sbr.rel (0) target = $region53
    $region52: #{tpu_custom_call.1} parent=1 // pred_region
      %100 = dma.done [#allocation9], 512
    $region53: #{tpu_custom_call.1} parent=1 // pred_fallthru
      _
    %v101 = vld [vmem:[#allocation2] sm:$0xff]
    %v102 = vld [vmem:[#allocation2 + $0x8] sm:$0xff]
    %v103 = vld [vmem:[#allocation5] sm:$0xff]
    %v104 = vld [vmem:[#allocation5 + $0x8] sm:$0xff]
    %v105 = vld [vmem:[#allocation7] sm:$0xff]
    %v106 = vld [vmem:[#allocation7 + $0x8] sm:$0xff]
    %v107 = vld [vmem:[#allocation7 + $0x10] sm:$0xff]
    %v108 = vld [vmem:[#allocation7 + $0x18] sm:$0xff]
    %v109 = vld [vmem:[%s3] sm:$0x1]
    %v111 = vlaneseq
    %v112 = vshrl.u32 %v111, 7
    %v113 = vsub.s32 0, %v112
    %v114 = vrot.slane %v109, %v113
    %vm116 = vcmask 261120
    %v118 = vsel %vm116, %v101, 0
    %v121 = vsel %vm116, %v102, 0
    %123 = vmatprep.subr.mxu0 0.0
    %124 = vmatpush1.msra.mxu0 0.0
    %125 = vmatprep.subr.mxu0 0.0
    %126 = vmatpush1.msra.mxu0 0.0
    %127 = vmatprep.subr.mxu0 0.0
    %128 = vmatpush1.msra.mxu0 0.0
    %129 = vmatprep.subr.mxu0 0.0
    %130 = vmatpush1.msra.mxu0 0.0
    %131 = vmatprep.subr.mxu0 0.0
    %132 = vmatpush1.msra.mxu0 0.0
    %133 = vmatprep.subr.mxu0 0.0
    %134 = vmatpush1.msra.mxu0 0.0
    %135 = vmatprep.subr.mxu0 0.0
    %136 = vmatpush1.msra.mxu0 0.0
    %137 = vmatprep.subr.mxu0 0.0
    %138 = vmatpush1.msra.mxu0 0.0
    %139 = vmatprep.subr.mxu0 0.0
    %140 = vmatpush1.msra.mxu0 0.0
    %141 = vmatprep.subr.mxu0 0.0
    %142 = vmatpush1.msra.mxu0 0.0
    %143 = vmatprep.subr.mxu0 0.0
    %144 = vmatpush1.msra.mxu0 0.0
    %145 = vmatprep.subr.mxu0 0.0
    %146 = vmatpush1.msra.mxu0 0.0
    %147 = vmatprep.subr.mxu0 0.0
    %148 = vmatpush1.msra.mxu0 %v108
    %149 = vmatprep.subr.mxu0 0.0
    %150 = vmatpush1.msra.mxu0 %v107
    %151 = vmatprep.subr.mxu0 0.0
    %152 = vmatpush1.msra.mxu0 %v106
    %153 = vmatprep.subr.mxu0 0.0
    %154 = vmatpush1.msra.mxu0 %v105
    %155 = vmatprep.subr.mxu0 0.0
    %156 = vmatpush2.msra.mxu0 0.0
    %157 = vmatprep.subr.mxu0 0.0
    %158 = vmatpush2.msra.mxu0 0.0
    %159 = vmatprep.subr.mxu0 0.0
    %160 = vmatpush2.msra.mxu0 0.0
    %161 = vmatprep.subr.mxu0 0.0
    %162 = vmatpush2.msra.mxu0 0.0
    %163 = vmatprep.subr.mxu0 0.0
    %164 = vmatpush2.msra.mxu0 0.0
    %165 = vmatprep.subr.mxu0 0.0
    %166 = vmatpush2.msra.mxu0 0.0
    %167 = vmatprep.subr.mxu0 0.0
    %168 = vmatpush2.msra.mxu0 0.0
    %169 = vmatprep.subr.mxu0 0.0
    %170 = vmatpush2.msra.mxu0 0.0
    %171 = vmatprep.subr.mxu0 0.0
    %172 = vmatpush2.msra.mxu0 0.0
    %173 = vmatprep.subr.mxu0 0.0
    %174 = vmatpush2.msra.mxu0 0.0
    %175 = vmatprep.subr.mxu0 0.0
    %176 = vmatpush2.msra.mxu0 0.0
    %177 = vmatprep.subr.mxu0 0.0
    %178 = vmatpush2.msra.mxu0 0.0
    %179 = vmatprep.subr.mxu0 0.0
    %180 = vmatpush2.msra.mxu0 0.0
    %181 = vmatprep.subr.mxu0 0.0
    %182 = vmatpush2.msra.mxu0 0.0
    %183 = vmatprep.subr.mxu0 0.0
    %184 = vmatpush2.msra.mxu0 0.0
    %185 = vmatprep.subr.mxu0 0.0
    %186 = vmatpush2.msra.mxu0 0.0
    %187 = vmatprep.mubr.f32.mxu0 0.0
    %188 = vmatmul.mubr.f32.gmra.mxu0 %v118
    %v189 = vpop.f32.mrf.mxu0
    %v190 = vadd.f32 %v114, %v189
    %v191 = vpop.f32.mrf.mxu0
    %192 = vmatprep.mubr.f32.mxu0 0.0
    %193 = vmatmul.mubr.f32.gmra.mxu0 %v121
    %v194 = vpop.f32.mrf.mxu0
    %v195 = vadd.f32 %v114, %v194
    %v196 = vpop.f32.mrf.mxu0
    %197 = vdwg.mxu0
    %v198 = vld [vmem:[#allocation8] sm:$0xff]
    %v199 = vld [vmem:[#allocation8 + $0x8] sm:$0xff]
    %v200 = vld [vmem:[#allocation8 + $0x10] sm:$0xff]
    %v201 = vld [vmem:[#allocation8 + $0x18] sm:$0xff]
    %v202 = vld [vmem:[%s5] sm:$0x1]
    %v204 = vlaneseq
    %v205 = vshrl.u32 %v204, 7
    %v206 = vsub.s32 0, %v205
    %v207 = vrot.slane %v202, %v206
    %v210 = vsel %vm116, %v103, 0
    %v213 = vsel %vm116, %v104, 0
    %215 = vmatprep.subr.mxu0 0.0
    %216 = vmatpush1.msra.mxu0 0.0
    %217 = vmatprep.subr.mxu0 0.0
    %218 = vmatpush1.msra.mxu0 0.0
    %219 = vmatprep.subr.mxu0 0.0
    %220 = vmatpush1.msra.mxu0 0.0
    %221 = vmatprep.subr.mxu0 0.0
    %222 = vmatpush1.msra.mxu0 0.0
    %223 = vmatprep.subr.mxu0 0.0
    %224 = vmatpush1.msra.mxu0 0.0
    %225 = vmatprep.subr.mxu0 0.0
    %226 = vmatpush1.msra.mxu0 0.0
    %227 = vmatprep.subr.mxu0 0.0
    %228 = vmatpush1.msra.mxu0 0.0
    %229 = vmatprep.subr.mxu0 0.0
    %230 = vmatpush1.msra.mxu0 0.0
    %231 = vmatprep.subr.mxu0 0.0
    %232 = vmatpush1.msra.mxu0 0.0
    %233 = vmatprep.subr.mxu0 0.0
    %234 = vmatpush1.msra.mxu0 0.0
    %235 = vmatprep.subr.mxu0 0.0
    %236 = vmatpush1.msra.mxu0 0.0
    %237 = vmatprep.subr.mxu0 0.0
    %238 = vmatpush1.msra.mxu0 0.0
    %239 = vmatprep.subr.mxu0 0.0
    %240 = vmatpush1.msra.mxu0 %v201
    %241 = vmatprep.subr.mxu0 0.0
    %242 = vmatpush1.msra.mxu0 %v200
    %243 = vmatprep.subr.mxu0 0.0
    %244 = vmatpush1.msra.mxu0 %v199
    %245 = vmatprep.subr.mxu0 0.0
    %246 = vmatpush1.msra.mxu0 %v198
    %247 = vmatprep.subr.mxu0 0.0
    %248 = vmatpush2.msra.mxu0 0.0
    %249 = vmatprep.subr.mxu0 0.0
    %250 = vmatpush2.msra.mxu0 0.0
    %251 = vmatprep.subr.mxu0 0.0
    %252 = vmatpush2.msra.mxu0 0.0
    %253 = vmatprep.subr.mxu0 0.0
    %254 = vmatpush2.msra.mxu0 0.0
    %255 = vmatprep.subr.mxu0 0.0
    %256 = vmatpush2.msra.mxu0 0.0
    %257 = vmatprep.subr.mxu0 0.0
    %258 = vmatpush2.msra.mxu0 0.0
    %259 = vmatprep.subr.mxu0 0.0
    %260 = vmatpush2.msra.mxu0 0.0
    %261 = vmatprep.subr.mxu0 0.0
    %262 = vmatpush2.msra.mxu0 0.0
    %263 = vmatprep.subr.mxu0 0.0
    %264 = vmatpush2.msra.mxu0 0.0
    %265 = vmatprep.subr.mxu0 0.0
    %266 = vmatpush2.msra.mxu0 0.0
    %267 = vmatprep.subr.mxu0 0.0
    %268 = vmatpush2.msra.mxu0 0.0
    %269 = vmatprep.subr.mxu0 0.0
    %270 = vmatpush2.msra.mxu0 0.0
    %271 = vmatprep.subr.mxu0 0.0
    %272 = vmatpush2.msra.mxu0 0.0
    %273 = vmatprep.subr.mxu0 0.0
    %274 = vmatpush2.msra.mxu0 0.0
    %275 = vmatprep.subr.mxu0 0.0
    %276 = vmatpush2.msra.mxu0 0.0
    %277 = vmatprep.subr.mxu0 0.0
    %278 = vmatpush2.msra.mxu0 0.0
    %279 = vmatprep.mubr.f32.mxu0 0.0
    %280 = vmatmul.mubr.f32.gmra.mxu0 %v210
    %v281 = vpop.f32.mrf.mxu0
    %v282 = vadd.f32 %v207, %v281
    %v283 = vpop.f32.mrf.mxu0
    %284 = vmatprep.mubr.f32.mxu0 0.0
    %285 = vmatmul.mubr.f32.gmra.mxu0 %v213
    %v286 = vpop.f32.mrf.mxu0
    %v287 = vadd.f32 %v207, %v286
    %v288 = vpop.f32.mrf.mxu0
    %289 = vdwg.mxu0
    %v290 = vmul.f32 %v190, 0.35355338
    %v291 = vmul.f32 %v195, 0.35355338
    %vm292 = vcmask 64512
    %v294 = vsel %vm292, %v290, 0
    %v297 = vsel %vm292, %v282, 0
    %299 = vmatprep.subr.mxu0 0.0
    %300 = vmatpush1.xpose.msra.mxu0 0.0
    %301 = vmatprep.subr.mxu0 0.0
    %302 = vmatpush1.xpose.msra.mxu0 0.0
    %303 = vmatprep.subr.mxu0 0.0
    %304 = vmatpush1.xpose.msra.mxu0 0.0
    %305 = vmatprep.subr.mxu0 0.0
    %306 = vmatpush1.xpose.msra.mxu0 0.0
    %307 = vmatprep.subr.mxu0 0.0
    %308 = vmatpush1.xpose.msra.mxu0 0.0
    %309 = vmatprep.subr.mxu0 0.0
    %310 = vmatpush1.xpose.msra.mxu0 0.0
    %311 = vmatprep.subr.mxu0 0.0
    %312 = vmatpush1.xpose.msra.mxu0 0.0
    %313 = vmatprep.subr.mxu0 0.0
    %314 = vmatpush1.xpose.msra.mxu0 0.0
    %315 = vmatprep.subr.mxu0 0.0
    %316 = vmatpush1.xpose.msra.mxu0 0.0
    %317 = vmatprep.subr.mxu0 0.0
    %318 = vmatpush1.xpose.msra.mxu0 0.0
    %319 = vmatprep.subr.mxu0 0.0
    %320 = vmatpush1.xpose.msra.mxu0 0.0
    %321 = vmatprep.subr.mxu0 0.0
    %322 = vmatpush1.xpose.msra.mxu0 0.0
    %323 = vmatprep.subr.mxu0 0.0
    %324 = vmatpush1.xpose.msra.mxu0 0.0
    %325 = vmatprep.subr.mxu0 0.0
    %326 = vmatpush1.xpose.msra.mxu0 0.0
    %327 = vmatprep.subr.mxu0 0.0
    %328 = vmatpush1.xpose.msra.mxu0 0.0
    %329 = vmatprep.subr.mxu0 0.0
    %330 = vmatpush1.xpose.msra.mxu0 %v297
    %331 = vmatprep.subr.mxu0 0.0
    %332 = vmatpush2.xpose.msra.mxu0 0.0
    %333 = vmatprep.subr.mxu0 0.0
    %334 = vmatpush2.xpose.msra.mxu0 0.0
    %335 = vmatprep.subr.mxu0 0.0
    %336 = vmatpush2.xpose.msra.mxu0 0.0
    %337 = vmatprep.subr.mxu0 0.0
    %338 = vmatpush2.xpose.msra.mxu0 0.0
    %339 = vmatprep.subr.mxu0 0.0
    %340 = vmatpush2.xpose.msra.mxu0 0.0
    %341 = vmatprep.subr.mxu0 0.0
    %342 = vmatpush2.xpose.msra.mxu0 0.0
    %343 = vmatprep.subr.mxu0 0.0
    %344 = vmatpush2.xpose.msra.mxu0 0.0
    %345 = vmatprep.subr.mxu0 0.0
    %346 = vmatpush2.xpose.msra.mxu0 0.0
    %347 = vmatprep.subr.mxu0 0.0
    %348 = vmatpush2.xpose.msra.mxu0 0.0
    %349 = vmatprep.subr.mxu0 0.0
    %350 = vmatpush2.xpose.msra.mxu0 0.0
    %351 = vmatprep.subr.mxu0 0.0
    %352 = vmatpush2.xpose.msra.mxu0 0.0
    %353 = vmatprep.subr.mxu0 0.0
    %354 = vmatpush2.xpose.msra.mxu0 0.0
    %355 = vmatprep.subr.mxu0 0.0
    %356 = vmatpush2.xpose.msra.mxu0 0.0
    %357 = vmatprep.subr.mxu0 0.0
    %358 = vmatpush2.xpose.msra.mxu0 0.0
    %359 = vmatprep.subr.mxu0 0.0
    %360 = vmatpush2.xpose.msra.mxu0 0.0
    %361 = vmatprep.subr.mxu0 0.0
    %362 = vmatpush2.xpose.msra.mxu0 0.0
    %363 = vmatprep.mubr.f32.mxu0 0.0
    %364 = vmatmul.mubr.f32.gmra.mxu0 %v294
    %v365 = vpop.f32.mrf.mxu0
    %v366 = vadd.f32 0.0, %v365
    %v367 = vpop.f32.mrf.mxu0
    %368 = vdwg.mxu0
    %v370 = vsel %vm292, %v291, 0
    %v373 = vsel %vm292, %v287, 0
    %375 = vmatprep.subr.mxu0 0.0
    %376 = vmatpush1.xpose.msra.mxu0 0.0
    %377 = vmatprep.subr.mxu0 0.0
    %378 = vmatpush1.xpose.msra.mxu0 0.0
    %379 = vmatprep.subr.mxu0 0.0
    %380 = vmatpush1.xpose.msra.mxu0 0.0
    %381 = vmatprep.subr.mxu0 0.0
    %382 = vmatpush1.xpose.msra.mxu0 0.0
    %383 = vmatprep.subr.mxu0 0.0
    %384 = vmatpush1.xpose.msra.mxu0 0.0
    %385 = vmatprep.subr.mxu0 0.0
    %386 = vmatpush1.xpose.msra.mxu0 0.0
    %387 = vmatprep.subr.mxu0 0.0
    %388 = vmatpush1.xpose.msra.mxu0 0.0
    %389 = vmatprep.subr.mxu0 0.0
    %390 = vmatpush1.xpose.msra.mxu0 0.0
    %391 = vmatprep.subr.mxu0 0.0
    %392 = vmatpush1.xpose.msra.mxu0 0.0
    %393 = vmatprep.subr.mxu0 0.0
    %394 = vmatpush1.xpose.msra.mxu0 0.0
    %395 = vmatprep.subr.mxu0 0.0
    %396 = vmatpush1.xpose.msra.mxu0 0.0
    %397 = vmatprep.subr.mxu0 0.0
    %398 = vmatpush1.xpose.msra.mxu0 0.0
    %399 = vmatprep.subr.mxu0 0.0
    %400 = vmatpush1.xpose.msra.mxu0 0.0
    %401 = vmatprep.subr.mxu0 0.0
    %402 = vmatpush1.xpose.msra.mxu0 0.0
    %403 = vmatprep.subr.mxu0 0.0
    %404 = vmatpush1.xpose.msra.mxu0 0.0
    %405 = vmatprep.subr.mxu0 0.0
    %406 = vmatpush1.xpose.msra.mxu0 %v373
    %407 = vmatprep.subr.mxu0 0.0
    %408 = vmatpush2.xpose.msra.mxu0 0.0
    %409 = vmatprep.subr.mxu0 0.0
    %410 = vmatpush2.xpose.msra.mxu0 0.0
    %411 = vmatprep.subr.mxu0 0.0
    %412 = vmatpush2.xpose.msra.mxu0 0.0
    %413 = vmatprep.subr.mxu0 0.0
    %414 = vmatpush2.xpose.msra.mxu0 0.0
    %415 = vmatprep.subr.mxu0 0.0
    %416 = vmatpush2.xpose.msra.mxu0 0.0
    %417 = vmatprep.subr.mxu0 0.0
    %418 = vmatpush2.xpose.msra.mxu0 0.0
    %419 = vmatprep.subr.mxu0 0.0
    %420 = vmatpush2.xpose.msra.mxu0 0.0
    %421 = vmatprep.subr.mxu0 0.0
    %422 = vmatpush2.xpose.msra.mxu0 0.0
    %423 = vmatprep.subr.mxu0 0.0
    %424 = vmatpush2.xpose.msra.mxu0 0.0
    %425 = vmatprep.subr.mxu0 0.0
    %426 = vmatpush2.xpose.msra.mxu0 0.0
    %427 = vmatprep.subr.mxu0 0.0
    %428 = vmatpush2.xpose.msra.mxu0 0.0
    %429 = vmatprep.subr.mxu0 0.0
    %430 = vmatpush2.xpose.msra.mxu0 0.0
    %431 = vmatprep.subr.mxu0 0.0
    %432 = vmatpush2.xpose.msra.mxu0 0.0
    %433 = vmatprep.subr.mxu0 0.0
    %434 = vmatpush2.xpose.msra.mxu0 0.0
    %435 = vmatprep.subr.mxu0 0.0
    %436 = vmatpush2.xpose.msra.mxu0 0.0
    %437 = vmatprep.subr.mxu0 0.0
    %438 = vmatpush2.xpose.msra.mxu0 0.0
    %439 = vmatprep.mubr.f32.mxu0 0.0
    %440 = vmatmul.mubr.f32.gmra.mxu0 %v370
    %v441 = vpop.f32.mrf.mxu0
    %v442 = vadd.f32 0.0, %v441
    %v443 = vpop.f32.mrf.mxu0
    %444 = vdwg.mxu0
    %v445 = vsel %vm292, %v366, -inf
    %446 = vmax.xlane.f32.xlu0 %v445
    %v447 = vpop.xlane.xlu0 %446
    %v448 = vsel %vm292, %v442, -inf
    %449 = vmax.xlane.f32.xlu0 %v448
    %v450 = vpop.xlane.xlu0 %449
    %v451 = vsub.f32 %v366, %v447
    %v452 = vsub.f32 %v442, %v450
    %v453 = vmul.f32 %v451, 1.442695
    %v454 = vpow.pop %v453
    %v455 = vmul.f32 %v452, 1.442695
    %v456 = vpow.pop %v455
    %v457 = vsel %vm292, %v454, 0.0
    %458 = vadd.xlane.f32.xlu0 %v457
    %v459 = vpop.xlane.xlu0 %458
    %v460 = vsel %vm292, %v456, 0.0
    %461 = vadd.xlane.f32.xlu0 %v460
    %v462 = vpop.xlane.xlu0 %461
    %v463 = vrcp.pop %v459
    %v464 = vrcp.pop %v462
    %v465 = vmul.f32 %v454, %v463
    %v466 = vmul.f32 %v456, %v464
    %v467 = vadd.f32 %v465, 0.0
    %v468 = vadd.f32 %v466, 0.0
    %469 = vrot.lane.b32.xlu0 %v282, 96
    %v470 = vpop.permute.xlu0 %469
    %v473 = vsel %vm292, %v465, 0
    %475 = vmatprep.subr.mxu0 0.0
    %476 = vmatpush1.msra.mxu0 0.0
    %477 = vmatprep.subr.mxu0 0.0
    %478 = vmatpush1.msra.mxu0 0.0
    %479 = vmatprep.subr.mxu0 0.0
    %480 = vmatpush1.msra.mxu0 0.0
    %481 = vmatprep.subr.mxu0 0.0
    %482 = vmatpush1.msra.mxu0 0.0
    %483 = vmatprep.subr.mxu0 0.0
    %484 = vmatpush1.msra.mxu0 0.0
    %485 = vmatprep.subr.mxu0 0.0
    %486 = vmatpush1.msra.mxu0 0.0
    %487 = vmatprep.subr.mxu0 0.0
    %488 = vmatpush1.msra.mxu0 0.0
    %489 = vmatprep.subr.mxu0 0.0
    %490 = vmatpush1.msra.mxu0 0.0
    %491 = vmatprep.subr.mxu0 0.0
    %492 = vmatpush1.msra.mxu0 0.0
    %493 = vmatprep.subr.mxu0 0.0
    %494 = vmatpush1.msra.mxu0 0.0
    %495 = vmatprep.subr.mxu0 0.0
    %496 = vmatpush1.msra.mxu0 0.0
    %497 = vmatprep.subr.mxu0 0.0
    %498 = vmatpush1.msra.mxu0 0.0
    %499 = vmatprep.subr.mxu0 0.0
    %500 = vmatpush1.msra.mxu0 0.0
    %501 = vmatprep.subr.mxu0 0.0
    %502 = vmatpush1.msra.mxu0 0.0
    %503 = vmatprep.subr.mxu0 0.0
    %504 = vmatpush1.msra.mxu0 0.0
    %505 = vmatprep.subr.mxu0 0.0
    %506 = vmatpush1.msra.mxu0 %v470
    %507 = vmatprep.subr.mxu0 0.0
    %508 = vmatpush2.msra.mxu0 0.0
    %509 = vmatprep.subr.mxu0 0.0
    %510 = vmatpush2.msra.mxu0 0.0
    %511 = vmatprep.subr.mxu0 0.0
    %512 = vmatpush2.msra.mxu0 0.0
    %513 = vmatprep.subr.mxu0 0.0
    %514 = vmatpush2.msra.mxu0 0.0
    %515 = vmatprep.subr.mxu0 0.0
    %516 = vmatpush2.msra.mxu0 0.0
    %517 = vmatprep.subr.mxu0 0.0
    %518 = vmatpush2.msra.mxu0 0.0
    %519 = vmatprep.subr.mxu0 0.0
    %520 = vmatpush2.msra.mxu0 0.0
    %521 = vmatprep.subr.mxu0 0.0
    %522 = vmatpush2.msra.mxu0 0.0
    %523 = vmatprep.subr.mxu0 0.0
    %524 = vmatpush2.msra.mxu0 0.0
    %525 = vmatprep.subr.mxu0 0.0
    %526 = vmatpush2.msra.mxu0 0.0
    %527 = vmatprep.subr.mxu0 0.0
    %528 = vmatpush2.msra.mxu0 0.0
    %529 = vmatprep.subr.mxu0 0.0
    %530 = vmatpush2.msra.mxu0 0.0
    %531 = vmatprep.subr.mxu0 0.0
    %532 = vmatpush2.msra.mxu0 0.0
    %533 = vmatprep.subr.mxu0 0.0
    %534 = vmatpush2.msra.mxu0 0.0
    %535 = vmatprep.subr.mxu0 0.0
    %536 = vmatpush2.msra.mxu0 0.0
    %537 = vmatprep.subr.mxu0 0.0
    %538 = vmatpush2.msra.mxu0 0.0
    %539 = vmatprep.mubr.f32.mxu0 0.0
    %540 = vmatmul.mubr.f32.gmra.mxu0 %v473
    %v541 = vpop.f32.mrf.mxu0
    %v542 = vadd.f32 0.0, %v541
    %v543 = vpop.f32.mrf.mxu0
    %544 = vdwg.mxu0
    %545 = vrot.lane.b32.xlu0 %v287, 96
    %v546 = vpop.permute.xlu0 %545
    %v549 = vsel %vm292, %v466, 0
    %551 = vmatprep.subr.mxu0 0.0
    %552 = vmatpush1.msra.mxu0 0.0
    %553 = vmatprep.subr.mxu0 0.0
    %554 = vmatpush1.msra.mxu0 0.0
    %555 = vmatprep.subr.mxu0 0.0
    %556 = vmatpush1.msra.mxu0 0.0
    %557 = vmatprep.subr.mxu0 0.0
    %558 = vmatpush1.msra.mxu0 0.0
    %559 = vmatprep.subr.mxu0 0.0
    %560 = vmatpush1.msra.mxu0 0.0
    %561 = vmatprep.subr.mxu0 0.0
    %562 = vmatpush1.msra.mxu0 0.0
    %563 = vmatprep.subr.mxu0 0.0
    %564 = vmatpush1.msra.mxu0 0.0
    %565 = vmatprep.subr.mxu0 0.0
    %566 = vmatpush1.msra.mxu0 0.0
    %567 = vmatprep.subr.mxu0 0.0
    %568 = vmatpush1.msra.mxu0 0.0
    %569 = vmatprep.subr.mxu0 0.0
    %570 = vmatpush1.msra.mxu0 0.0
    %571 = vmatprep.subr.mxu0 0.0
    %572 = vmatpush1.msra.mxu0 0.0
    %573 = vmatprep.subr.mxu0 0.0
    %574 = vmatpush1.msra.mxu0 0.0
    %575 = vmatprep.subr.mxu0 0.0
    %576 = vmatpush1.msra.mxu0 0.0
    %577 = vmatprep.subr.mxu0 0.0
    %578 = vmatpush1.msra.mxu0 0.0
    %579 = vmatprep.subr.mxu0 0.0
    %580 = vmatpush1.msra.mxu0 0.0
    %581 = vmatprep.subr.mxu0 0.0
    %582 = vmatpush1.msra.mxu0 %v546
    %583 = vmatprep.subr.mxu0 0.0
    %584 = vmatpush2.msra.mxu0 0.0
    %585 = vmatprep.subr.mxu0 0.0
    %586 = vmatpush2.msra.mxu0 0.0
    %587 = vmatprep.subr.mxu0 0.0
    %588 = vmatpush2.msra.mxu0 0.0
    %589 = vmatprep.subr.mxu0 0.0
    %590 = vmatpush2.msra.mxu0 0.0
    %591 = vmatprep.subr.mxu0 0.0
    %592 = vmatpush2.msra.mxu0 0.0
    %593 = vmatprep.subr.mxu0 0.0
    %594 = vmatpush2.msra.mxu0 0.0
    %595 = vmatprep.subr.mxu0 0.0
    %596 = vmatpush2.msra.mxu0 0.0
    %597 = vmatprep.subr.mxu0 0.0
    %598 = vmatpush2.msra.mxu0 0.0
    %599 = vmatprep.subr.mxu0 0.0
    %600 = vmatpush2.msra.mxu0 0.0
    %601 = vmatprep.subr.mxu0 0.0
    %602 = vmatpush2.msra.mxu0 0.0
    %603 = vmatprep.subr.mxu0 0.0
    %604 = vmatpush2.msra.mxu0 0.0
    %605 = vmatprep.subr.mxu0 0.0
    %606 = vmatpush2.msra.mxu0 0.0
    %607 = vmatprep.subr.mxu0 0.0
    %608 = vmatpush2.msra.mxu0 0.0
    %609 = vmatprep.subr.mxu0 0.0
    %610 = vmatpush2.msra.mxu0 0.0
    %611 = vmatprep.subr.mxu0 0.0
    %612 = vmatpush2.msra.mxu0 0.0
    %613 = vmatprep.subr.mxu0 0.0
    %614 = vmatpush2.msra.mxu0 0.0
    %615 = vmatprep.mubr.f32.mxu0 0.0
    %616 = vmatmul.mubr.f32.gmra.mxu0 %v549
    %v617 = vpop.f32.mrf.mxu0
    %v618 = vadd.f32 0.0, %v617
    %v619 = vpop.f32.mrf.mxu0
    %620 = vdwg.mxu0
    %v621 = vld [vmem:[#allocation10] sm:$0xff]
    %622 = vrot.lane.b32.xlu0 %v290, 120
    %v623 = vpop.permute.xlu0 %622
    %624 = vrot.lane.b32.xlu0 %v282, 120
    %v625 = vpop.permute.xlu0 %624
    %v626 = vsel %vm292, %v623, 0
    %v628 = vsel %vm292, %v625, 0
    %630 = vmatprep.subr.mxu0 0.0
    %631 = vmatpush1.xpose.msra.mxu0 0.0
    %632 = vmatprep.subr.mxu0 0.0
    %633 = vmatpush1.xpose.msra.mxu0 0.0
    %634 = vmatprep.subr.mxu0 0.0
    %635 = vmatpush1.xpose.msra.mxu0 0.0
    %636 = vmatprep.subr.mxu0 0.0
    %637 = vmatpush1.xpose.msra.mxu0 0.0
    %638 = vmatprep.subr.mxu0 0.0
    %639 = vmatpush1.xpose.msra.mxu0 0.0
    %640 = vmatprep.subr.mxu0 0.0
    %641 = vmatpush1.xpose.msra.mxu0 0.0
    %642 = vmatprep.subr.mxu0 0.0
    %643 = vmatpush1.xpose.msra.mxu0 0.0
    %644 = vmatprep.subr.mxu0 0.0
    %645 = vmatpush1.xpose.msra.mxu0 0.0
    %646 = vmatprep.subr.mxu0 0.0
    %647 = vmatpush1.xpose.msra.mxu0 0.0
    %648 = vmatprep.subr.mxu0 0.0
    %649 = vmatpush1.xpose.msra.mxu0 0.0
    %650 = vmatprep.subr.mxu0 0.0
    %651 = vmatpush1.xpose.msra.mxu0 0.0
    %652 = vmatprep.subr.mxu0 0.0
    %653 = vmatpush1.xpose.msra.mxu0 0.0
    %654 = vmatprep.subr.mxu0 0.0
    %655 = vmatpush1.xpose.msra.mxu0 0.0
    %656 = vmatprep.subr.mxu0 0.0
    %657 = vmatpush1.xpose.msra.mxu0 0.0
    %658 = vmatprep.subr.mxu0 0.0
    %659 = vmatpush1.xpose.msra.mxu0 0.0
    %660 = vmatprep.subr.mxu0 0.0
    %661 = vmatpush1.xpose.msra.mxu0 %v628
    %662 = vmatprep.subr.mxu0 0.0
    %663 = vmatpush2.xpose.msra.mxu0 0.0
    %664 = vmatprep.subr.mxu0 0.0
    %665 = vmatpush2.xpose.msra.mxu0 0.0
    %666 = vmatprep.subr.mxu0 0.0
    %667 = vmatpush2.xpose.msra.mxu0 0.0
    %668 = vmatprep.subr.mxu0 0.0
    %669 = vmatpush2.xpose.msra.mxu0 0.0
    %670 = vmatprep.subr.mxu0 0.0
    %671 = vmatpush2.xpose.msra.mxu0 0.0
    %672 = vmatprep.subr.mxu0 0.0
    %673 = vmatpush2.xpose.msra.mxu0 0.0
    %674 = vmatprep.subr.mxu0 0.0
    %675 = vmatpush2.xpose.msra.mxu0 0.0
    %676 = vmatprep.subr.mxu0 0.0
    %677 = vmatpush2.xpose.msra.mxu0 0.0
    %678 = vmatprep.subr.mxu0 0.0
    %679 = vmatpush2.xpose.msra.mxu0 0.0
    %680 = vmatprep.subr.mxu0 0.0
    %681 = vmatpush2.xpose.msra.mxu0 0.0
    %682 = vmatprep.subr.mxu0 0.0
    %683 = vmatpush2.xpose.msra.mxu0 0.0
    %684 = vmatprep.subr.mxu0 0.0
    %685 = vmatpush2.xpose.msra.mxu0 0.0
    %686 = vmatprep.subr.mxu0 0.0
    %687 = vmatpush2.xpose.msra.mxu0 0.0
    %688 = vmatprep.subr.mxu0 0.0
    %689 = vmatpush2.xpose.msra.mxu0 0.0
    %690 = vmatprep.subr.mxu0 0.0
    %691 = vmatpush2.xpose.msra.mxu0 0.0
    %692 = vmatprep.subr.mxu0 0.0
    %693 = vmatpush2.xpose.msra.mxu0 0.0
    %694 = vmatprep.mubr.f32.mxu0 0.0
    %695 = vmatmul.mubr.f32.gmra.mxu0 %v626
    %v696 = vpop.f32.mrf.mxu0
    %v697 = vadd.f32 0.0, %v696
    %v698 = vpop.f32.mrf.mxu0
    %699 = vdwg.mxu0
    %700 = vrot.lane.b32.xlu0 %v291, 120
    %v701 = vpop.permute.xlu0 %700
    %702 = vrot.lane.b32.xlu0 %v287, 120
    %v703 = vpop.permute.xlu0 %702
    %v704 = vsel %vm292, %v701, 0
    %v706 = vsel %vm292, %v703, 0
    %708 = vmatprep.subr.mxu0 0.0
    %709 = vmatpush1.xpose.msra.mxu0 0.0
    %710 = vmatprep.subr.mxu0 0.0
    %711 = vmatpush1.xpose.msra.mxu0 0.0
    %712 = vmatprep.subr.mxu0 0.0
    %713 = vmatpush1.xpose.msra.mxu0 0.0
    %714 = vmatprep.subr.mxu0 0.0
    %715 = vmatpush1.xpose.msra.mxu0 0.0
    %716 = vmatprep.subr.mxu0 0.0
    %717 = vmatpush1.xpose.msra.mxu0 0.0
    %718 = vmatprep.subr.mxu0 0.0
    %719 = vmatpush1.xpose.msra.mxu0 0.0
    %720 = vmatprep.subr.mxu0 0.0
    %721 = vmatpush1.xpose.msra.mxu0 0.0
    %722 = vmatprep.subr.mxu0 0.0
    %723 = vmatpush1.xpose.msra.mxu0 0.0
    %724 = vmatprep.subr.mxu0 0.0
    %725 = vmatpush1.xpose.msra.mxu0 0.0
    %726 = vmatprep.subr.mxu0 0.0
    %727 = vmatpush1.xpose.msra.mxu0 0.0
    %728 = vmatprep.subr.mxu0 0.0
    %729 = vmatpush1.xpose.msra.mxu0 0.0
    %730 = vmatprep.subr.mxu0 0.0
    %731 = vmatpush1.xpose.msra.mxu0 0.0
    %732 = vmatprep.subr.mxu0 0.0
    %733 = vmatpush1.xpose.msra.mxu0 0.0
    %734 = vmatprep.subr.mxu0 0.0
    %735 = vmatpush1.xpose.msra.mxu0 0.0
    %736 = vmatprep.subr.mxu0 0.0
    %737 = vmatpush1.xpose.msra.mxu0 0.0
    %738 = vmatprep.subr.mxu0 0.0
    %739 = vmatpush1.xpose.msra.mxu0 %v706
    %740 = vmatprep.subr.mxu0 0.0
    %741 = vmatpush2.xpose.msra.mxu0 0.0
    %742 = vmatprep.subr.mxu0 0.0
    %743 = vmatpush2.xpose.msra.mxu0 0.0
    %744 = vmatprep.subr.mxu0 0.0
    %745 = vmatpush2.xpose.msra.mxu0 0.0
    %746 = vmatprep.subr.mxu0 0.0
    %747 = vmatpush2.xpose.msra.mxu0 0.0
    %748 = vmatprep.subr.mxu0 0.0
    %749 = vmatpush2.xpose.msra.mxu0 0.0
    %750 = vmatprep.subr.mxu0 0.0
    %751 = vmatpush2.xpose.msra.mxu0 0.0
    %752 = vmatprep.subr.mxu0 0.0
    %753 = vmatpush2.xpose.msra.mxu0 0.0
    %754 = vmatprep.subr.mxu0 0.0
    %755 = vmatpush2.xpose.msra.mxu0 0.0
    %756 = vmatprep.subr.mxu0 0.0
    %757 = vmatpush2.xpose.msra.mxu0 0.0
    %758 = vmatprep.subr.mxu0 0.0
    %759 = vmatpush2.xpose.msra.mxu0 0.0
    %760 = vmatprep.subr.mxu0 0.0
    %761 = vmatpush2.xpose.msra.mxu0 0.0
    %762 = vmatprep.subr.mxu0 0.0
    %763 = vmatpush2.xpose.msra.mxu0 0.0
    %764 = vmatprep.subr.mxu0 0.0
    %765 = vmatpush2.xpose.msra.mxu0 0.0
    %766 = vmatprep.subr.mxu0 0.0
    %767 = vmatpush2.xpose.msra.mxu0 0.0
    %768 = vmatprep.subr.mxu0 0.0
    %769 = vmatpush2.xpose.msra.mxu0 0.0
    %770 = vmatprep.subr.mxu0 0.0
    %771 = vmatpush2.xpose.msra.mxu0 0.0
    %772 = vmatprep.mubr.f32.mxu0 0.0
    %773 = vmatmul.mubr.f32.gmra.mxu0 %v704
    %v774 = vpop.f32.mrf.mxu0
    %v775 = vadd.f32 0.0, %v774
    %v776 = vpop.f32.mrf.mxu0
    %777 = vdwg.mxu0
    %v778 = vsel %vm292, %v697, -inf
    %779 = vmax.xlane.f32.xlu0 %v778
    %v780 = vpop.xlane.xlu0 %779
    %v781 = vsel %vm292, %v775, -inf
    %782 = vmax.xlane.f32.xlu0 %v781
    %v783 = vpop.xlane.xlu0 %782
    %v784 = vsub.f32 %v697, %v780
    %v785 = vsub.f32 %v775, %v783
    %v786 = vmul.f32 %v784, 1.442695
    %v787 = vpow.pop %v786
    %v788 = vmul.f32 %v785, 1.442695
    %v789 = vpow.pop %v788
    %v790 = vsel %vm292, %v787, 0.0
    %791 = vadd.xlane.f32.xlu0 %v790
    %v792 = vpop.xlane.xlu0 %791
    %v793 = vsel %vm292, %v789, 0.0
    %794 = vadd.xlane.f32.xlu0 %v793
    %v795 = vpop.xlane.xlu0 %794
    %v796 = vrcp.pop %v792
    %v797 = vrcp.pop %v795
    %v798 = vmul.f32 %v787, %v796
    %v799 = vmul.f32 %v789, %v797
    %v800 = vadd.f32 %v467, %v798
    %v801 = vadd.f32 %v468, %v799
    %802 = vrot.lane.b32.xlu0 %v282, 88
    %v803 = vpop.permute.xlu0 %802
    %v806 = vsel %vm292, %v798, 0
    %808 = vmatprep.subr.mxu0 0.0
    %809 = vmatpush1.msra.mxu0 0.0
    %810 = vmatprep.subr.mxu0 0.0
    %811 = vmatpush1.msra.mxu0 0.0
    %812 = vmatprep.subr.mxu0 0.0
    %813 = vmatpush1.msra.mxu0 0.0
    %814 = vmatprep.subr.mxu0 0.0
    %815 = vmatpush1.msra.mxu0 0.0
    %816 = vmatprep.subr.mxu0 0.0
    %817 = vmatpush1.msra.mxu0 0.0
    %818 = vmatprep.subr.mxu0 0.0
    %819 = vmatpush1.msra.mxu0 0.0
    %820 = vmatprep.subr.mxu0 0.0
    %821 = vmatpush1.msra.mxu0 0.0
    %822 = vmatprep.subr.mxu0 0.0
    %823 = vmatpush1.msra.mxu0 0.0
    %824 = vmatprep.subr.mxu0 0.0
    %825 = vmatpush1.msra.mxu0 0.0
    %826 = vmatprep.subr.mxu0 0.0
    %827 = vmatpush1.msra.mxu0 0.0
    %828 = vmatprep.subr.mxu0 0.0
    %829 = vmatpush1.msra.mxu0 0.0
    %830 = vmatprep.subr.mxu0 0.0
    %831 = vmatpush1.msra.mxu0 0.0
    %832 = vmatprep.subr.mxu0 0.0
    %833 = vmatpush1.msra.mxu0 0.0
    %834 = vmatprep.subr.mxu0 0.0
    %835 = vmatpush1.msra.mxu0 0.0
    %836 = vmatprep.subr.mxu0 0.0
    %837 = vmatpush1.msra.mxu0 0.0
    %838 = vmatprep.subr.mxu0 0.0
    %839 = vmatpush1.msra.mxu0 %v803
    %840 = vmatprep.subr.mxu0 0.0
    %841 = vmatpush2.msra.mxu0 0.0
    %842 = vmatprep.subr.mxu0 0.0
    %843 = vmatpush2.msra.mxu0 0.0
    %844 = vmatprep.subr.mxu0 0.0
    %845 = vmatpush2.msra.mxu0 0.0
    %846 = vmatprep.subr.mxu0 0.0
    %847 = vmatpush2.msra.mxu0 0.0
    %848 = vmatprep.subr.mxu0 0.0
    %849 = vmatpush2.msra.mxu0 0.0
    %850 = vmatprep.subr.mxu0 0.0
    %851 = vmatpush2.msra.mxu0 0.0
    %852 = vmatprep.subr.mxu0 0.0
    %853 = vmatpush2.msra.mxu0 0.0
    %854 = vmatprep.subr.mxu0 0.0
    %855 = vmatpush2.msra.mxu0 0.0
    %856 = vmatprep.subr.mxu0 0.0
    %857 = vmatpush2.msra.mxu0 0.0
    %858 = vmatprep.subr.mxu0 0.0
    %859 = vmatpush2.msra.mxu0 0.0
    %860 = vmatprep.subr.mxu0 0.0
    %861 = vmatpush2.msra.mxu0 0.0
    %862 = vmatprep.subr.mxu0 0.0
    %863 = vmatpush2.msra.mxu0 0.0
    %864 = vmatprep.subr.mxu0 0.0
    %865 = vmatpush2.msra.mxu0 0.0
    %866 = vmatprep.subr.mxu0 0.0
    %867 = vmatpush2.msra.mxu0 0.0
    %868 = vmatprep.subr.mxu0 0.0
    %869 = vmatpush2.msra.mxu0 0.0
    %870 = vmatprep.subr.mxu0 0.0
    %871 = vmatpush2.msra.mxu0 0.0
    %872 = vmatprep.mubr.f32.mxu0 0.0
    %873 = vmatmul.mubr.f32.gmra.mxu0 %v806
    %v874 = vpop.f32.mrf.mxu0
    %v875 = vadd.f32 0.0, %v874
    %v876 = vpop.f32.mrf.mxu0
    %877 = vdwg.mxu0
    %878 = vrot.lane.b32.xlu0 %v287, 88
    %v879 = vpop.permute.xlu0 %878
    %v882 = vsel %vm292, %v799, 0
    %884 = vmatprep.subr.mxu0 0.0
    %885 = vmatpush1.msra.mxu0 0.0
    %886 = vmatprep.subr.mxu0 0.0
    %887 = vmatpush1.msra.mxu0 0.0
    %888 = vmatprep.subr.mxu0 0.0
    %889 = vmatpush1.msra.mxu0 0.0
    %890 = vmatprep.subr.mxu0 0.0
    %891 = vmatpush1.msra.mxu0 0.0
    %892 = vmatprep.subr.mxu0 0.0
    %893 = vmatpush1.msra.mxu0 0.0
    %894 = vmatprep.subr.mxu0 0.0
    %895 = vmatpush1.msra.mxu0 0.0
    %896 = vmatprep.subr.mxu0 0.0
    %897 = vmatpush1.msra.mxu0 0.0
    %898 = vmatprep.subr.mxu0 0.0
    %899 = vmatpush1.msra.mxu0 0.0
    %900 = vmatprep.subr.mxu0 0.0
    %901 = vmatpush1.msra.mxu0 0.0
    %902 = vmatprep.subr.mxu0 0.0
    %903 = vmatpush1.msra.mxu0 0.0
    %904 = vmatprep.subr.mxu0 0.0
    %905 = vmatpush1.msra.mxu0 0.0
    %906 = vmatprep.subr.mxu0 0.0
    %907 = vmatpush1.msra.mxu0 0.0
    %908 = vmatprep.subr.mxu0 0.0
    %909 = vmatpush1.msra.mxu0 0.0
    %910 = vmatprep.subr.mxu0 0.0
    %911 = vmatpush1.msra.mxu0 0.0
    %912 = vmatprep.subr.mxu0 0.0
    %913 = vmatpush1.msra.mxu0 0.0
    %914 = vmatprep.subr.mxu0 0.0
    %915 = vmatpush1.msra.mxu0 %v879
    %916 = vmatprep.subr.mxu0 0.0
    %917 = vmatpush2.msra.mxu0 0.0
    %918 = vmatprep.subr.mxu0 0.0
    %919 = vmatpush2.msra.mxu0 0.0
    %920 = vmatprep.subr.mxu0 0.0
    %921 = vmatpush2.msra.mxu0 0.0
    %922 = vmatprep.subr.mxu0 0.0
    %923 = vmatpush2.msra.mxu0 0.0
    %924 = vmatprep.subr.mxu0 0.0
    %925 = vmatpush2.msra.mxu0 0.0
    %926 = vmatprep.subr.mxu0 0.0
    %927 = vmatpush2.msra.mxu0 0.0
    %928 = vmatprep.subr.mxu0 0.0
    %929 = vmatpush2.msra.mxu0 0.0
    %930 = vmatprep.subr.mxu0 0.0
    %931 = vmatpush2.msra.mxu0 0.0
    %932 = vmatprep.subr.mxu0 0.0
    %933 = vmatpush2.msra.mxu0 0.0
    %934 = vmatprep.subr.mxu0 0.0
    %935 = vmatpush2.msra.mxu0 0.0
    %936 = vmatprep.subr.mxu0 0.0
    %937 = vmatpush2.msra.mxu0 0.0
    %938 = vmatprep.subr.mxu0 0.0
    %939 = vmatpush2.msra.mxu0 0.0
    %940 = vmatprep.subr.mxu0 0.0
    %941 = vmatpush2.msra.mxu0 0.0
    %942 = vmatprep.subr.mxu0 0.0
    %943 = vmatpush2.msra.mxu0 0.0
    %944 = vmatprep.subr.mxu0 0.0
    %945 = vmatpush2.msra.mxu0 0.0
    %946 = vmatprep.subr.mxu0 0.0
    %947 = vmatpush2.msra.mxu0 0.0
    %948 = vmatprep.mubr.f32.mxu0 0.0
    %949 = vmatmul.mubr.f32.gmra.mxu0 %v882
    %v950 = vpop.f32.mrf.mxu0
    %v951 = vadd.f32 0.0, %v950
    %v952 = vpop.f32.mrf.mxu0
    %953 = vdwg.mxu0
    %v954 = vld [vmem:[#allocation10 + $0x8] sm:$0xff]
    %v956 = vsel %vm292, %v875, 0
    %v959 = vsel %vm292, %v951, 0
    %961 = vmatprep.subr.mxu0 0.0
    %962 = vmatpush1.msra.mxu0 0.0
    %963 = vmatprep.subr.mxu0 0.0
    %964 = vmatpush1.msra.mxu0 0.0
    %965 = vmatprep.subr.mxu0 0.0
    %966 = vmatpush1.msra.mxu0 0.0
    %967 = vmatprep.subr.mxu0 0.0
    %968 = vmatpush1.msra.mxu0 0.0
    %969 = vmatprep.subr.mxu0 0.0
    %970 = vmatpush1.msra.mxu0 0.0
    %971 = vmatprep.subr.mxu0 0.0
    %972 = vmatpush1.msra.mxu0 0.0
    %973 = vmatprep.subr.mxu0 0.0
    %974 = vmatpush1.msra.mxu0 0.0
    %975 = vmatprep.subr.mxu0 0.0
    %976 = vmatpush1.msra.mxu0 0.0
    %977 = vmatprep.subr.mxu0 0.0
    %978 = vmatpush1.msra.mxu0 0.0
    %979 = vmatprep.subr.mxu0 0.0
    %980 = vmatpush1.msra.mxu0 0.0
    %981 = vmatprep.subr.mxu0 0.0
    %982 = vmatpush1.msra.mxu0 0.0
    %983 = vmatprep.subr.mxu0 0.0
    %984 = vmatpush1.msra.mxu0 0.0
    %985 = vmatprep.subr.mxu0 0.0
    %986 = vmatpush1.msra.mxu0 0.0
    %987 = vmatprep.subr.mxu0 0.0
    %988 = vmatpush1.msra.mxu0 0.0
    %989 = vmatprep.subr.mxu0 0.0
    %990 = vmatpush1.msra.mxu0 0.0
    %991 = vmatprep.subr.mxu0 0.0
    %992 = vmatpush1.msra.mxu0 %v954
    %993 = vmatprep.subr.mxu0 0.0
    %994 = vmatpush2.msra.mxu0 0.0
    %995 = vmatprep.subr.mxu0 0.0
    %996 = vmatpush2.msra.mxu0 0.0
    %997 = vmatprep.subr.mxu0 0.0
    %998 = vmatpush2.msra.mxu0 0.0
    %999 = vmatprep.subr.mxu0 0.0
    %1000 = vmatpush2.msra.mxu0 0.0
    %1001 = vmatprep.subr.mxu0 0.0
    %1002 = vmatpush2.msra.mxu0 0.0
    %1003 = vmatprep.subr.mxu0 0.0
    %1004 = vmatpush2.msra.mxu0 0.0
    %1005 = vmatprep.subr.mxu0 0.0
    %1006 = vmatpush2.msra.mxu0 0.0
    %1007 = vmatprep.subr.mxu0 0.0
    %1008 = vmatpush2.msra.mxu0 0.0
    %1009 = vmatprep.subr.mxu0 0.0
    %1010 = vmatpush2.msra.mxu0 0.0
    %1011 = vmatprep.subr.mxu0 0.0
    %1012 = vmatpush2.msra.mxu0 0.0
    %1013 = vmatprep.subr.mxu0 0.0
    %1014 = vmatpush2.msra.mxu0 0.0
    %1015 = vmatprep.subr.mxu0 0.0
    %1016 = vmatpush2.msra.mxu0 0.0
    %1017 = vmatprep.subr.mxu0 0.0
    %1018 = vmatpush2.msra.mxu0 0.0
    %1019 = vmatprep.subr.mxu0 0.0
    %1020 = vmatpush2.msra.mxu0 0.0
    %1021 = vmatprep.subr.mxu0 0.0
    %1022 = vmatpush2.msra.mxu0 0.0
    %1023 = vmatprep.subr.mxu0 0.0
    %1024 = vmatpush2.msra.mxu0 0.0
    %1025 = vmatprep.mubr.f32.mxu0 0.0
    %1026 = vmatmul.mubr.f32.gmra.mxu0 %v956
    %v1027 = vpop.f32.mrf.mxu0
    %v1028 = vadd.f32 0.0, %v1027
    %v1029 = vpop.f32.mrf.mxu0
    %1030 = vmatprep.mubr.f32.mxu0 0.0
    %1031 = vmatmul.mubr.f32.gmra.mxu0 %v959
    %v1032 = vpop.f32.mrf.mxu0
    %v1033 = vadd.f32 0.0, %v1032
    %v1034 = vpop.f32.mrf.mxu0
    %1035 = vdwg.mxu0
    %v1037 = vsel %vm292, %v542, 0
    %v1040 = vsel %vm292, %v618, 0
    %1042 = vmatprep.subr.mxu0 0.0
    %1043 = vmatpush1.msra.mxu0 0.0
    %1044 = vmatprep.subr.mxu0 0.0
    %1045 = vmatpush1.msra.mxu0 0.0
    %1046 = vmatprep.subr.mxu0 0.0
    %1047 = vmatpush1.msra.mxu0 0.0
    %1048 = vmatprep.subr.mxu0 0.0
    %1049 = vmatpush1.msra.mxu0 0.0
    %1050 = vmatprep.subr.mxu0 0.0
    %1051 = vmatpush1.msra.mxu0 0.0
    %1052 = vmatprep.subr.mxu0 0.0
    %1053 = vmatpush1.msra.mxu0 0.0
    %1054 = vmatprep.subr.mxu0 0.0
    %1055 = vmatpush1.msra.mxu0 0.0
    %1056 = vmatprep.subr.mxu0 0.0
    %1057 = vmatpush1.msra.mxu0 0.0
    %1058 = vmatprep.subr.mxu0 0.0
    %1059 = vmatpush1.msra.mxu0 0.0
    %1060 = vmatprep.subr.mxu0 0.0
    %1061 = vmatpush1.msra.mxu0 0.0
    %1062 = vmatprep.subr.mxu0 0.0
    %1063 = vmatpush1.msra.mxu0 0.0
    %1064 = vmatprep.subr.mxu0 0.0
    %1065 = vmatpush1.msra.mxu0 0.0
    %1066 = vmatprep.subr.mxu0 0.0
    %1067 = vmatpush1.msra.mxu0 0.0
    %1068 = vmatprep.subr.mxu0 0.0
    %1069 = vmatpush1.msra.mxu0 0.0
    %1070 = vmatprep.subr.mxu0 0.0
    %1071 = vmatpush1.msra.mxu0 0.0
    %1072 = vmatprep.subr.mxu0 0.0
    %1073 = vmatpush1.msra.mxu0 %v621
    %1074 = vmatprep.subr.mxu0 0.0
    %1075 = vmatpush2.msra.mxu0 0.0
    %1076 = vmatprep.subr.mxu0 0.0
    %1077 = vmatpush2.msra.mxu0 0.0
    %1078 = vmatprep.subr.mxu0 0.0
    %1079 = vmatpush2.msra.mxu0 0.0
    %1080 = vmatprep.subr.mxu0 0.0
    %1081 = vmatpush2.msra.mxu0 0.0
    %1082 = vmatprep.subr.mxu0 0.0
    %1083 = vmatpush2.msra.mxu0 0.0
    %1084 = vmatprep.subr.mxu0 0.0
    %1085 = vmatpush2.msra.mxu0 0.0
    %1086 = vmatprep.subr.mxu0 0.0
    %1087 = vmatpush2.msra.mxu0 0.0
    %1088 = vmatprep.subr.mxu0 0.0
    %1089 = vmatpush2.msra.mxu0 0.0
    %1090 = vmatprep.subr.mxu0 0.0
    %1091 = vmatpush2.msra.mxu0 0.0
    %1092 = vmatprep.subr.mxu0 0.0
    %1093 = vmatpush2.msra.mxu0 0.0
    %1094 = vmatprep.subr.mxu0 0.0
    %1095 = vmatpush2.msra.mxu0 0.0
    %1096 = vmatprep.subr.mxu0 0.0
    %1097 = vmatpush2.msra.mxu0 0.0
    %1098 = vmatprep.subr.mxu0 0.0
    %1099 = vmatpush2.msra.mxu0 0.0
    %1100 = vmatprep.subr.mxu0 0.0
    %1101 = vmatpush2.msra.mxu0 0.0
    %1102 = vmatprep.subr.mxu0 0.0
    %1103 = vmatpush2.msra.mxu0 0.0
    %1104 = vmatprep.subr.mxu0 0.0
    %1105 = vmatpush2.msra.mxu0 0.0
    %1106 = vmatprep.mubr.f32.mxu0 0.0
    %1107 = vmatmul.mubr.f32.gmra.mxu0 %v1037
    %v1108 = vpop.f32.mrf.mxu0
    %v1109 = vadd.f32 %v1028, %v1108
    %v1110 = vpop.f32.mrf.mxu0
    %1111 = vmatprep.mubr.f32.mxu0 0.0
    %1112 = vmatmul.mubr.f32.gmra.mxu0 %v1040
    %v1113 = vpop.f32.mrf.mxu0
    %v1114 = vadd.f32 %v1033, %v1113
    %v1115 = vpop.f32.mrf.mxu0
    %1116 = vdwg.mxu0
    %1117 = vrot.lane.b32.xlu0 %v290, 112
    %v1118 = vpop.permute.xlu0 %1117
    %1119 = vrot.lane.b32.xlu0 %v282, 112
    %v1120 = vpop.permute.xlu0 %1119
    %v1121 = vsel %vm292, %v1118, 0
    %v1123 = vsel %vm292, %v1120, 0
    %1125 = vmatprep.subr.mxu0 0.0
    %1126 = vmatpush1.xpose.msra.mxu0 0.0
    %1127 = vmatprep.subr.mxu0 0.0
    %1128 = vmatpush1.xpose.msra.mxu0 0.0
    %1129 = vmatprep.subr.mxu0 0.0
    %1130 = vmatpush1.xpose.msra.mxu0 0.0
    %1131 = vmatprep.subr.mxu0 0.0
    %1132 = vmatpush1.xpose.msra.mxu0 0.0
    %1133 = vmatprep.subr.mxu0 0.0
    %1134 = vmatpush1.xpose.msra.mxu0 0.0
    %1135 = vmatprep.subr.mxu0 0.0
    %1136 = vmatpush1.xpose.msra.mxu0 0.0
    %1137 = vmatprep.subr.mxu0 0.0
    %1138 = vmatpush1.xpose.msra.mxu0 0.0
    %1139 = vmatprep.subr.mxu0 0.0
    %1140 = vmatpush1.xpose.msra.mxu0 0.0
    %1141 = vmatprep.subr.mxu0 0.0
    %1142 = vmatpush1.xpose.msra.mxu0 0.0
    %1143 = vmatprep.subr.mxu0 0.0
    %1144 = vmatpush1.xpose.msra.mxu0 0.0
    %1145 = vmatprep.subr.mxu0 0.0
    %1146 = vmatpush1.xpose.msra.mxu0 0.0
    %1147 = vmatprep.subr.mxu0 0.0
    %1148 = vmatpush1.xpose.msra.mxu0 0.0
    %1149 = vmatprep.subr.mxu0 0.0
    %1150 = vmatpush1.xpose.msra.mxu0 0.0
    %1151 = vmatprep.subr.mxu0 0.0
    %1152 = vmatpush1.xpose.msra.mxu0 0.0
    %1153 = vmatprep.subr.mxu0 0.0
    %1154 = vmatpush1.xpose.msra.mxu0 0.0
    %1155 = vmatprep.subr.mxu0 0.0
    %1156 = vmatpush1.xpose.msra.mxu0 %v1123
    %1157 = vmatprep.subr.mxu0 0.0
    %1158 = vmatpush2.xpose.msra.mxu0 0.0
    %1159 = vmatprep.subr.mxu0 0.0
    %1160 = vmatpush2.xpose.msra.mxu0 0.0
    %1161 = vmatprep.subr.mxu0 0.0
    %1162 = vmatpush2.xpose.msra.mxu0 0.0
    %1163 = vmatprep.subr.mxu0 0.0
    %1164 = vmatpush2.xpose.msra.mxu0 0.0
    %1165 = vmatprep.subr.mxu0 0.0
    %1166 = vmatpush2.xpose.msra.mxu0 0.0
    %1167 = vmatprep.subr.mxu0 0.0
    %1168 = vmatpush2.xpose.msra.mxu0 0.0
    %1169 = vmatprep.subr.mxu0 0.0
    %1170 = vmatpush2.xpose.msra.mxu0 0.0
    %1171 = vmatprep.subr.mxu0 0.0
    %1172 = vmatpush2.xpose.msra.mxu0 0.0
    %1173 = vmatprep.subr.mxu0 0.0
    %1174 = vmatpush2.xpose.msra.mxu0 0.0
    %1175 = vmatprep.subr.mxu0 0.0
    %1176 = vmatpush2.xpose.msra.mxu0 0.0
    %1177 = vmatprep.subr.mxu0 0.0
    %1178 = vmatpush2.xpose.msra.mxu0 0.0
    %1179 = vmatprep.subr.mxu0 0.0
    %1180 = vmatpush2.xpose.msra.mxu0 0.0
    %1181 = vmatprep.subr.mxu0 0.0
    %1182 = vmatpush2.xpose.msra.mxu0 0.0
    %1183 = vmatprep.subr.mxu0 0.0
    %1184 = vmatpush2.xpose.msra.mxu0 0.0
    %1185 = vmatprep.subr.mxu0 0.0
    %1186 = vmatpush2.xpose.msra.mxu0 0.0
    %1187 = vmatprep.subr.mxu0 0.0
    %1188 = vmatpush2.xpose.msra.mxu0 0.0
    %1189 = vmatprep.mubr.f32.mxu0 0.0
    %1190 = vmatmul.mubr.f32.gmra.mxu0 %v1121
    %v1191 = vpop.f32.mrf.mxu0
    %v1192 = vadd.f32 0.0, %v1191
    %v1193 = vpop.f32.mrf.mxu0
    %1194 = vdwg.mxu0
    %1195 = vrot.lane.b32.xlu0 %v291, 112
    %v1196 = vpop.permute.xlu0 %1195
    %1197 = vrot.lane.b32.xlu0 %v287, 112
    %v1198 = vpop.permute.xlu0 %1197
    %v1199 = vsel %vm292, %v1196, 0
    %v1201 = vsel %vm292, %v1198, 0
    %1203 = vmatprep.subr.mxu0 0.0
    %1204 = vmatpush1.xpose.msra.mxu0 0.0
    %1205 = vmatprep.subr.mxu0 0.0
    %1206 = vmatpush1.xpose.msra.mxu0 0.0
    %1207 = vmatprep.subr.mxu0 0.0
    %1208 = vmatpush1.xpose.msra.mxu0 0.0
    %1209 = vmatprep.subr.mxu0 0.0
    %1210 = vmatpush1.xpose.msra.mxu0 0.0
    %1211 = vmatprep.subr.mxu0 0.0
    %1212 = vmatpush1.xpose.msra.mxu0 0.0
    %1213 = vmatprep.subr.mxu0 0.0
    %1214 = vmatpush1.xpose.msra.mxu0 0.0
    %1215 = vmatprep.subr.mxu0 0.0
    %1216 = vmatpush1.xpose.msra.mxu0 0.0
    %1217 = vmatprep.subr.mxu0 0.0
    %1218 = vmatpush1.xpose.msra.mxu0 0.0
    %1219 = vmatprep.subr.mxu0 0.0
    %1220 = vmatpush1.xpose.msra.mxu0 0.0
    %1221 = vmatprep.subr.mxu0 0.0
    %1222 = vmatpush1.xpose.msra.mxu0 0.0
    %1223 = vmatprep.subr.mxu0 0.0
    %1224 = vmatpush1.xpose.msra.mxu0 0.0
    %1225 = vmatprep.subr.mxu0 0.0
    %1226 = vmatpush1.xpose.msra.mxu0 0.0
    %1227 = vmatprep.subr.mxu0 0.0
    %1228 = vmatpush1.xpose.msra.mxu0 0.0
    %1229 = vmatprep.subr.mxu0 0.0
    %1230 = vmatpush1.xpose.msra.mxu0 0.0
    %1231 = vmatprep.subr.mxu0 0.0
    %1232 = vmatpush1.xpose.msra.mxu0 0.0
    %1233 = vmatprep.subr.mxu0 0.0
    %1234 = vmatpush1.xpose.msra.mxu0 %v1201
    %1235 = vmatprep.subr.mxu0 0.0
    %1236 = vmatpush2.xpose.msra.mxu0 0.0
    %1237 = vmatprep.subr.mxu0 0.0
    %1238 = vmatpush2.xpose.msra.mxu0 0.0
    %1239 = vmatprep.subr.mxu0 0.0
    %1240 = vmatpush2.xpose.msra.mxu0 0.0
    %1241 = vmatprep.subr.mxu0 0.0
    %1242 = vmatpush2.xpose.msra.mxu0 0.0
    %1243 = vmatprep.subr.mxu0 0.0
    %1244 = vmatpush2.xpose.msra.mxu0 0.0
    %1245 = vmatprep.subr.mxu0 0.0
    %1246 = vmatpush2.xpose.msra.mxu0 0.0
    %1247 = vmatprep.subr.mxu0 0.0
    %1248 = vmatpush2.xpose.msra.mxu0 0.0
    %1249 = vmatprep.subr.mxu0 0.0
    %1250 = vmatpush2.xpose.msra.mxu0 0.0
    %1251 = vmatprep.subr.mxu0 0.0
    %1252 = vmatpush2.xpose.msra.mxu0 0.0
    %1253 = vmatprep.subr.mxu0 0.0
    %1254 = vmatpush2.xpose.msra.mxu0 0.0
    %1255 = vmatprep.subr.mxu0 0.0
    %1256 = vmatpush2.xpose.msra.mxu0 0.0
    %1257 = vmatprep.subr.mxu0 0.0
    %1258 = vmatpush2.xpose.msra.mxu0 0.0
    %1259 = vmatprep.subr.mxu0 0.0
    %1260 = vmatpush2.xpose.msra.mxu0 0.0
    %1261 = vmatprep.subr.mxu0 0.0
    %1262 = vmatpush2.xpose.msra.mxu0 0.0
    %1263 = vmatprep.subr.mxu0 0.0
    %1264 = vmatpush2.xpose.msra.mxu0 0.0
    %1265 = vmatprep.subr.mxu0 0.0
    %1266 = vmatpush2.xpose.msra.mxu0 0.0
    %1267 = vmatprep.mubr.f32.mxu0 0.0
    %1268 = vmatmul.mubr.f32.gmra.mxu0 %v1199
    %v1269 = vpop.f32.mrf.mxu0
    %v1270 = vadd.f32 0.0, %v1269
    %v1271 = vpop.f32.mrf.mxu0
    %1272 = vdwg.mxu0
    %v1273 = vsel %vm292, %v1192, -inf
    %1274 = vmax.xlane.f32.xlu0 %v1273
    %v1275 = vpop.xlane.xlu0 %1274
    %v1276 = vsel %vm292, %v1270, -inf
    %1277 = vmax.xlane.f32.xlu0 %v1276
    %v1278 = vpop.xlane.xlu0 %1277
    %v1279 = vsub.f32 %v1192, %v1275
    %v1280 = vsub.f32 %v1270, %v1278
    %v1281 = vmul.f32 %v1279, 1.442695
    %v1282 = vpow.pop %v1281
    %v1283 = vmul.f32 %v1280, 1.442695
    %v1284 = vpow.pop %v1283
    %v1285 = vsel %vm292, %v1282, 0.0
    %1286 = vadd.xlane.f32.xlu0 %v1285
    %v1287 = vpop.xlane.xlu0 %1286
    %v1288 = vsel %vm292, %v1284, 0.0
    %1289 = vadd.xlane.f32.xlu0 %v1288
    %v1290 = vpop.xlane.xlu0 %1289
    %v1291 = vrcp.pop %v1287
    %v1292 = vrcp.pop %v1290
    %v1293 = vmul.f32 %v1282, %v1291
    %v1294 = vmul.f32 %v1284, %v1292
    %v1295 = vadd.f32 %v800, %v1293
    %v1296 = vadd.f32 %v801, %v1294
    %1297 = vrot.lane.b32.xlu0 %v282, 80
    %v1298 = vpop.permute.xlu0 %1297
    %v1301 = vsel %vm292, %v1293, 0
    %1303 = vmatprep.subr.mxu0 0.0
    %1304 = vmatpush1.msra.mxu0 0.0
    %1305 = vmatprep.subr.mxu0 0.0
    %1306 = vmatpush1.msra.mxu0 0.0
    %1307 = vmatprep.subr.mxu0 0.0
    %1308 = vmatpush1.msra.mxu0 0.0
    %1309 = vmatprep.subr.mxu0 0.0
    %1310 = vmatpush1.msra.mxu0 0.0
    %1311 = vmatprep.subr.mxu0 0.0
    %1312 = vmatpush1.msra.mxu0 0.0
    %1313 = vmatprep.subr.mxu0 0.0
    %1314 = vmatpush1.msra.mxu0 0.0
    %1315 = vmatprep.subr.mxu0 0.0
    %1316 = vmatpush1.msra.mxu0 0.0
    %1317 = vmatprep.subr.mxu0 0.0
    %1318 = vmatpush1.msra.mxu0 0.0
    %1319 = vmatprep.subr.mxu0 0.0
    %1320 = vmatpush1.msra.mxu0 0.0
    %1321 = vmatprep.subr.mxu0 0.0
    %1322 = vmatpush1.msra.mxu0 0.0
    %1323 = vmatprep.subr.mxu0 0.0
    %1324 = vmatpush1.msra.mxu0 0.0
    %1325 = vmatprep.subr.mxu0 0.0
    %1326 = vmatpush1.msra.mxu0 0.0
    %1327 = vmatprep.subr.mxu0 0.0
    %1328 = vmatpush1.msra.mxu0 0.0
    %1329 = vmatprep.subr.mxu0 0.0
    %1330 = vmatpush1.msra.mxu0 0.0
    %1331 = vmatprep.subr.mxu0 0.0
    %1332 = vmatpush1.msra.mxu0 0.0
    %1333 = vmatprep.subr.mxu0 0.0
    %1334 = vmatpush1.msra.mxu0 %v1298
    %1335 = vmatprep.subr.mxu0 0.0
    %1336 = vmatpush2.msra.mxu0 0.0
    %1337 = vmatprep.subr.mxu0 0.0
    %1338 = vmatpush2.msra.mxu0 0.0
    %1339 = vmatprep.subr.mxu0 0.0
    %1340 = vmatpush2.msra.mxu0 0.0
    %1341 = vmatprep.subr.mxu0 0.0
    %1342 = vmatpush2.msra.mxu0 0.0
    %1343 = vmatprep.subr.mxu0 0.0
    %1344 = vmatpush2.msra.mxu0 0.0
    %1345 = vmatprep.subr.mxu0 0.0
    %1346 = vmatpush2.msra.mxu0 0.0
    %1347 = vmatprep.subr.mxu0 0.0
    %1348 = vmatpush2.msra.mxu0 0.0
    %1349 = vmatprep.subr.mxu0 0.0
    %1350 = vmatpush2.msra.mxu0 0.0
    %1351 = vmatprep.subr.mxu0 0.0
    %1352 = vmatpush2.msra.mxu0 0.0
    %1353 = vmatprep.subr.mxu0 0.0
    %1354 = vmatpush2.msra.mxu0 0.0
    %1355 = vmatprep.subr.mxu0 0.0
    %1356 = vmatpush2.msra.mxu0 0.0
    %1357 = vmatprep.subr.mxu0 0.0
    %1358 = vmatpush2.msra.mxu0 0.0
    %1359 = vmatprep.subr.mxu0 0.0
    %1360 = vmatpush2.msra.mxu0 0.0
    %1361 = vmatprep.subr.mxu0 0.0
    %1362 = vmatpush2.msra.mxu0 0.0
    %1363 = vmatprep.subr.mxu0 0.0
    %1364 = vmatpush2.msra.mxu0 0.0
    %1365 = vmatprep.subr.mxu0 0.0
    %1366 = vmatpush2.msra.mxu0 0.0
    %1367 = vmatprep.mubr.f32.mxu0 0.0
    %1368 = vmatmul.mubr.f32.gmra.mxu0 %v1301
    %v1369 = vpop.f32.mrf.mxu0
    %v1370 = vadd.f32 0.0, %v1369
    %v1371 = vpop.f32.mrf.mxu0
    %1372 = vdwg.mxu0
    %1373 = vrot.lane.b32.xlu0 %v287, 80
    %v1374 = vpop.permute.xlu0 %1373
    %v1377 = vsel %vm292, %v1294, 0
    %1379 = vmatprep.subr.mxu0 0.0
    %1380 = vmatpush1.msra.mxu0 0.0
    %1381 = vmatprep.subr.mxu0 0.0
    %1382 = vmatpush1.msra.mxu0 0.0
    %1383 = vmatprep.subr.mxu0 0.0
    %1384 = vmatpush1.msra.mxu0 0.0
    %1385 = vmatprep.subr.mxu0 0.0
    %1386 = vmatpush1.msra.mxu0 0.0
    %1387 = vmatprep.subr.mxu0 0.0
    %1388 = vmatpush1.msra.mxu0 0.0
    %1389 = vmatprep.subr.mxu0 0.0
    %1390 = vmatpush1.msra.mxu0 0.0
    %1391 = vmatprep.subr.mxu0 0.0
    %1392 = vmatpush1.msra.mxu0 0.0
    %1393 = vmatprep.subr.mxu0 0.0
    %1394 = vmatpush1.msra.mxu0 0.0
    %1395 = vmatprep.subr.mxu0 0.0
    %1396 = vmatpush1.msra.mxu0 0.0
    %1397 = vmatprep.subr.mxu0 0.0
    %1398 = vmatpush1.msra.mxu0 0.0
    %1399 = vmatprep.subr.mxu0 0.0
    %1400 = vmatpush1.msra.mxu0 0.0
    %1401 = vmatprep.subr.mxu0 0.0
    %1402 = vmatpush1.msra.mxu0 0.0
    %1403 = vmatprep.subr.mxu0 0.0
    %1404 = vmatpush1.msra.mxu0 0.0
    %1405 = vmatprep.subr.mxu0 0.0
    %1406 = vmatpush1.msra.mxu0 0.0
    %1407 = vmatprep.subr.mxu0 0.0
    %1408 = vmatpush1.msra.mxu0 0.0
    %1409 = vmatprep.subr.mxu0 0.0
    %1410 = vmatpush1.msra.mxu0 %v1374
    %1411 = vmatprep.subr.mxu0 0.0
    %1412 = vmatpush2.msra.mxu0 0.0
    %1413 = vmatprep.subr.mxu0 0.0
    %1414 = vmatpush2.msra.mxu0 0.0
    %1415 = vmatprep.subr.mxu0 0.0
    %1416 = vmatpush2.msra.mxu0 0.0
    %1417 = vmatprep.subr.mxu0 0.0
    %1418 = vmatpush2.msra.mxu0 0.0
    %1419 = vmatprep.subr.mxu0 0.0
    %1420 = vmatpush2.msra.mxu0 0.0
    %1421 = vmatprep.subr.mxu0 0.0
    %1422 = vmatpush2.msra.mxu0 0.0
    %1423 = vmatprep.subr.mxu0 0.0
    %1424 = vmatpush2.msra.mxu0 0.0
    %1425 = vmatprep.subr.mxu0 0.0
    %1426 = vmatpush2.msra.mxu0 0.0
    %1427 = vmatprep.subr.mxu0 0.0
    %1428 = vmatpush2.msra.mxu0 0.0
    %1429 = vmatprep.subr.mxu0 0.0
    %1430 = vmatpush2.msra.mxu0 0.0
    %1431 = vmatprep.subr.mxu0 0.0
    %1432 = vmatpush2.msra.mxu0 0.0
    %1433 = vmatprep.subr.mxu0 0.0
    %1434 = vmatpush2.msra.mxu0 0.0
    %1435 = vmatprep.subr.mxu0 0.0
    %1436 = vmatpush2.msra.mxu0 0.0
    %1437 = vmatprep.subr.mxu0 0.0
    %1438 = vmatpush2.msra.mxu0 0.0
    %1439 = vmatprep.subr.mxu0 0.0
    %1440 = vmatpush2.msra.mxu0 0.0
    %1441 = vmatprep.subr.mxu0 0.0
    %1442 = vmatpush2.msra.mxu0 0.0
    %1443 = vmatprep.mubr.f32.mxu0 0.0
    %1444 = vmatmul.mubr.f32.gmra.mxu0 %v1377
    %v1445 = vpop.f32.mrf.mxu0
    %v1446 = vadd.f32 0.0, %v1445
    %v1447 = vpop.f32.mrf.mxu0
    %1448 = vdwg.mxu0
    %v1449 = vld [vmem:[#allocation10 + $0x10] sm:$0xff]
    %v1451 = vsel %vm292, %v1370, 0
    %v1454 = vsel %vm292, %v1446, 0
    %1456 = vmatprep.subr.mxu0 0.0
    %1457 = vmatpush1.msra.mxu0 0.0
    %1458 = vmatprep.subr.mxu0 0.0
    %1459 = vmatpush1.msra.mxu0 0.0
    %1460 = vmatprep.subr.mxu0 0.0
    %1461 = vmatpush1.msra.mxu0 0.0
    %1462 = vmatprep.subr.mxu0 0.0
    %1463 = vmatpush1.msra.mxu0 0.0
    %1464 = vmatprep.subr.mxu0 0.0
    %1465 = vmatpush1.msra.mxu0 0.0
    %1466 = vmatprep.subr.mxu0 0.0
    %1467 = vmatpush1.msra.mxu0 0.0
    %1468 = vmatprep.subr.mxu0 0.0
    %1469 = vmatpush1.msra.mxu0 0.0
    %1470 = vmatprep.subr.mxu0 0.0
    %1471 = vmatpush1.msra.mxu0 0.0
    %1472 = vmatprep.subr.mxu0 0.0
    %1473 = vmatpush1.msra.mxu0 0.0
    %1474 = vmatprep.subr.mxu0 0.0
    %1475 = vmatpush1.msra.mxu0 0.0
    %1476 = vmatprep.subr.mxu0 0.0
    %1477 = vmatpush1.msra.mxu0 0.0
    %1478 = vmatprep.subr.mxu0 0.0
    %1479 = vmatpush1.msra.mxu0 0.0
    %1480 = vmatprep.subr.mxu0 0.0
    %1481 = vmatpush1.msra.mxu0 0.0
    %1482 = vmatprep.subr.mxu0 0.0
    %1483 = vmatpush1.msra.mxu0 0.0
    %1484 = vmatprep.subr.mxu0 0.0
    %1485 = vmatpush1.msra.mxu0 0.0
    %1486 = vmatprep.subr.mxu0 0.0
    %1487 = vmatpush1.msra.mxu0 %v1449
    %1488 = vmatprep.subr.mxu0 0.0
    %1489 = vmatpush2.msra.mxu0 0.0
    %1490 = vmatprep.subr.mxu0 0.0
    %1491 = vmatpush2.msra.mxu0 0.0
    %1492 = vmatprep.subr.mxu0 0.0
    %1493 = vmatpush2.msra.mxu0 0.0
    %1494 = vmatprep.subr.mxu0 0.0
    %1495 = vmatpush2.msra.mxu0 0.0
    %1496 = vmatprep.subr.mxu0 0.0
    %1497 = vmatpush2.msra.mxu0 0.0
    %1498 = vmatprep.subr.mxu0 0.0
    %1499 = vmatpush2.msra.mxu0 0.0
    %1500 = vmatprep.subr.mxu0 0.0
    %1501 = vmatpush2.msra.mxu0 0.0
    %1502 = vmatprep.subr.mxu0 0.0
    %1503 = vmatpush2.msra.mxu0 0.0
    %1504 = vmatprep.subr.mxu0 0.0
    %1505 = vmatpush2.msra.mxu0 0.0
    %1506 = vmatprep.subr.mxu0 0.0
    %1507 = vmatpush2.msra.mxu0 0.0
    %1508 = vmatprep.subr.mxu0 0.0
    %1509 = vmatpush2.msra.mxu0 0.0
    %1510 = vmatprep.subr.mxu0 0.0
    %1511 = vmatpush2.msra.mxu0 0.0
    %1512 = vmatprep.subr.mxu0 0.0
    %1513 = vmatpush2.msra.mxu0 0.0
    %1514 = vmatprep.subr.mxu0 0.0
    %1515 = vmatpush2.msra.mxu0 0.0
    %1516 = vmatprep.subr.mxu0 0.0
    %1517 = vmatpush2.msra.mxu0 0.0
    %1518 = vmatprep.subr.mxu0 0.0
    %1519 = vmatpush2.msra.mxu0 0.0
    %1520 = vmatprep.mubr.f32.mxu0 0.0
    %1521 = vmatmul.mubr.f32.gmra.mxu0 %v1451
    %v1522 = vpop.f32.mrf.mxu0
    %v1523 = vadd.f32 0.0, %v1522
    %v1524 = vpop.f32.mrf.mxu0
    %1525 = vmatprep.mubr.f32.mxu0 0.0
    %1526 = vmatmul.mubr.f32.gmra.mxu0 %v1454
    %v1527 = vpop.f32.mrf.mxu0
    %v1528 = vadd.f32 0.0, %v1527
    %v1529 = vpop.f32.mrf.mxu0
    %1530 = vdwg.mxu0
    %v1531 = vadd.f32 %v1109, %v1523
    %v1532 = vadd.f32 %v1114, %v1528
    %1533 = vrot.lane.b32.xlu0 %v290, 104
    %v1534 = vpop.permute.xlu0 %1533
    %1535 = vrot.lane.b32.xlu0 %v282, 104
    %v1536 = vpop.permute.xlu0 %1535
    %v1537 = vsel %vm292, %v1534, 0
    %v1539 = vsel %vm292, %v1536, 0
    %1541 = vmatprep.subr.mxu0 0.0
    %1542 = vmatpush1.xpose.msra.mxu0 0.0
    %1543 = vmatprep.subr.mxu0 0.0
    %1544 = vmatpush1.xpose.msra.mxu0 0.0
    %1545 = vmatprep.subr.mxu0 0.0
    %1546 = vmatpush1.xpose.msra.mxu0 0.0
    %1547 = vmatprep.subr.mxu0 0.0
    %1548 = vmatpush1.xpose.msra.mxu0 0.0
    %1549 = vmatprep.subr.mxu0 0.0
    %1550 = vmatpush1.xpose.msra.mxu0 0.0
    %1551 = vmatprep.subr.mxu0 0.0
    %1552 = vmatpush1.xpose.msra.mxu0 0.0
    %1553 = vmatprep.subr.mxu0 0.0
    %1554 = vmatpush1.xpose.msra.mxu0 0.0
    %1555 = vmatprep.subr.mxu0 0.0
    %1556 = vmatpush1.xpose.msra.mxu0 0.0
    %1557 = vmatprep.subr.mxu0 0.0
    %1558 = vmatpush1.xpose.msra.mxu0 0.0
    %1559 = vmatprep.subr.mxu0 0.0
    %1560 = vmatpush1.xpose.msra.mxu0 0.0
    %1561 = vmatprep.subr.mxu0 0.0
    %1562 = vmatpush1.xpose.msra.mxu0 0.0
    %1563 = vmatprep.subr.mxu0 0.0
    %1564 = vmatpush1.xpose.msra.mxu0 0.0
    %1565 = vmatprep.subr.mxu0 0.0
    %1566 = vmatpush1.xpose.msra.mxu0 0.0
    %1567 = vmatprep.subr.mxu0 0.0
    %1568 = vmatpush1.xpose.msra.mxu0 0.0
    %1569 = vmatprep.subr.mxu0 0.0
    %1570 = vmatpush1.xpose.msra.mxu0 0.0
    %1571 = vmatprep.subr.mxu0 0.0
    %1572 = vmatpush1.xpose.msra.mxu0 %v1539
    %1573 = vmatprep.subr.mxu0 0.0
    %1574 = vmatpush2.xpose.msra.mxu0 0.0
    %1575 = vmatprep.subr.mxu0 0.0
    %1576 = vmatpush2.xpose.msra.mxu0 0.0
    %1577 = vmatprep.subr.mxu0 0.0
    %1578 = vmatpush2.xpose.msra.mxu0 0.0
    %1579 = vmatprep.subr.mxu0 0.0
    %1580 = vmatpush2.xpose.msra.mxu0 0.0
    %1581 = vmatprep.subr.mxu0 0.0
    %1582 = vmatpush2.xpose.msra.mxu0 0.0
    %1583 = vmatprep.subr.mxu0 0.0
    %1584 = vmatpush2.xpose.msra.mxu0 0.0
    %1585 = vmatprep.subr.mxu0 0.0
    %1586 = vmatpush2.xpose.msra.mxu0 0.0
    %1587 = vmatprep.subr.mxu0 0.0
    %1588 = vmatpush2.xpose.msra.mxu0 0.0
    %1589 = vmatprep.subr.mxu0 0.0
    %1590 = vmatpush2.xpose.msra.mxu0 0.0
    %1591 = vmatprep.subr.mxu0 0.0
    %1592 = vmatpush2.xpose.msra.mxu0 0.0
    %1593 = vmatprep.subr.mxu0 0.0
    %1594 = vmatpush2.xpose.msra.mxu0 0.0
    %1595 = vmatprep.subr.mxu0 0.0
    %1596 = vmatpush2.xpose.msra.mxu0 0.0
    %1597 = vmatprep.subr.mxu0 0.0
    %1598 = vmatpush2.xpose.msra.mxu0 0.0
    %1599 = vmatprep.subr.mxu0 0.0
    %1600 = vmatpush2.xpose.msra.mxu0 0.0
    %1601 = vmatprep.subr.mxu0 0.0
    %1602 = vmatpush2.xpose.msra.mxu0 0.0
    %1603 = vmatprep.subr.mxu0 0.0
    %1604 = vmatpush2.xpose.msra.mxu0 0.0
    %1605 = vmatprep.mubr.f32.mxu0 0.0
    %1606 = vmatmul.mubr.f32.gmra.mxu0 %v1537
    %v1607 = vpop.f32.mrf.mxu0
    %v1608 = vadd.f32 0.0, %v1607
    %v1609 = vpop.f32.mrf.mxu0
    %1610 = vdwg.mxu0
    %1611 = vrot.lane.b32.xlu0 %v291, 104
    %v1612 = vpop.permute.xlu0 %1611
    %1613 = vrot.lane.b32.xlu0 %v287, 104
    %v1614 = vpop.permute.xlu0 %1613
    %v1615 = vsel %vm292, %v1612, 0
    %v1617 = vsel %vm292, %v1614, 0
    %1619 = vmatprep.subr.mxu0 0.0
    %1620 = vmatpush1.xpose.msra.mxu0 0.0
    %1621 = vmatprep.subr.mxu0 0.0
    %1622 = vmatpush1.xpose.msra.mxu0 0.0
    %1623 = vmatprep.subr.mxu0 0.0
    %1624 = vmatpush1.xpose.msra.mxu0 0.0
    %1625 = vmatprep.subr.mxu0 0.0
    %1626 = vmatpush1.xpose.msra.mxu0 0.0
    %1627 = vmatprep.subr.mxu0 0.0
    %1628 = vmatpush1.xpose.msra.mxu0 0.0
    %1629 = vmatprep.subr.mxu0 0.0
    %1630 = vmatpush1.xpose.msra.mxu0 0.0
    %1631 = vmatprep.subr.mxu0 0.0
    %1632 = vmatpush1.xpose.msra.mxu0 0.0
    %1633 = vmatprep.subr.mxu0 0.0
    %1634 = vmatpush1.xpose.msra.mxu0 0.0
    %1635 = vmatprep.subr.mxu0 0.0
    %1636 = vmatpush1.xpose.msra.mxu0 0.0
    %1637 = vmatprep.subr.mxu0 0.0
    %1638 = vmatpush1.xpose.msra.mxu0 0.0
    %1639 = vmatprep.subr.mxu0 0.0
    %1640 = vmatpush1.xpose.msra.mxu0 0.0
    %1641 = vmatprep.subr.mxu0 0.0
    %1642 = vmatpush1.xpose.msra.mxu0 0.0
    %1643 = vmatprep.subr.mxu0 0.0
    %1644 = vmatpush1.xpose.msra.mxu0 0.0
    %1645 = vmatprep.subr.mxu0 0.0
    %1646 = vmatpush1.xpose.msra.mxu0 0.0
    %1647 = vmatprep.subr.mxu0 0.0
    %1648 = vmatpush1.xpose.msra.mxu0 0.0
    %1649 = vmatprep.subr.mxu0 0.0
    %1650 = vmatpush1.xpose.msra.mxu0 %v1617
    %1651 = vmatprep.subr.mxu0 0.0
    %1652 = vmatpush2.xpose.msra.mxu0 0.0
    %1653 = vmatprep.subr.mxu0 0.0
    %1654 = vmatpush2.xpose.msra.mxu0 0.0
    %1655 = vmatprep.subr.mxu0 0.0
    %1656 = vmatpush2.xpose.msra.mxu0 0.0
    %1657 = vmatprep.subr.mxu0 0.0
    %1658 = vmatpush2.xpose.msra.mxu0 0.0
    %1659 = vmatprep.subr.mxu0 0.0
    %1660 = vmatpush2.xpose.msra.mxu0 0.0
    %1661 = vmatprep.subr.mxu0 0.0
    %1662 = vmatpush2.xpose.msra.mxu0 0.0
    %1663 = vmatprep.subr.mxu0 0.0
    %1664 = vmatpush2.xpose.msra.mxu0 0.0
    %1665 = vmatprep.subr.mxu0 0.0
    %1666 = vmatpush2.xpose.msra.mxu0 0.0
    %1667 = vmatprep.subr.mxu0 0.0
    %1668 = vmatpush2.xpose.msra.mxu0 0.0
    %1669 = vmatprep.subr.mxu0 0.0
    %1670 = vmatpush2.xpose.msra.mxu0 0.0
    %1671 = vmatprep.subr.mxu0 0.0
    %1672 = vmatpush2.xpose.msra.mxu0 0.0
    %1673 = vmatprep.subr.mxu0 0.0
    %1674 = vmatpush2.xpose.msra.mxu0 0.0
    %1675 = vmatprep.subr.mxu0 0.0
    %1676 = vmatpush2.xpose.msra.mxu0 0.0
    %1677 = vmatprep.subr.mxu0 0.0
    %1678 = vmatpush2.xpose.msra.mxu0 0.0
    %1679 = vmatprep.subr.mxu0 0.0
    %1680 = vmatpush2.xpose.msra.mxu0 0.0
    %1681 = vmatprep.subr.mxu0 0.0
    %1682 = vmatpush2.xpose.msra.mxu0 0.0
    %1683 = vmatprep.mubr.f32.mxu0 0.0
    %1684 = vmatmul.mubr.f32.gmra.mxu0 %v1615
    %v1685 = vpop.f32.mrf.mxu0
    %v1686 = vadd.f32 0.0, %v1685
    %v1687 = vpop.f32.mrf.mxu0
    %1688 = vdwg.mxu0
    %v1689 = vsel %vm292, %v1608, -inf
    %1690 = vmax.xlane.f32.xlu0 %v1689
    %v1691 = vpop.xlane.xlu0 %1690
    %v1692 = vsel %vm292, %v1686, -inf
    %1693 = vmax.xlane.f32.xlu0 %v1692
    %v1694 = vpop.xlane.xlu0 %1693
    %v1695 = vsub.f32 %v1608, %v1691
    %v1696 = vsub.f32 %v1686, %v1694
    %v1697 = vmul.f32 %v1695, 1.442695
    %v1698 = vpow.pop %v1697
    %v1699 = vmul.f32 %v1696, 1.442695
    %v1700 = vpow.pop %v1699
    %v1701 = vsel %vm292, %v1698, 0.0
    %1702 = vadd.xlane.f32.xlu0 %v1701
    %v1703 = vpop.xlane.xlu0 %1702
    %v1704 = vsel %vm292, %v1700, 0.0
    %1705 = vadd.xlane.f32.xlu0 %v1704
    %v1706 = vpop.xlane.xlu0 %1705
    %v1707 = vrcp.pop %v1703
    %v1708 = vrcp.pop %v1706
    %v1709 = vmul.f32 %v1698, %v1707
    %v1710 = vmul.f32 %v1700, %v1708
    %v1711 = vadd.f32 %v1295, %v1709
    %v1712 = vadd.f32 %v1296, %v1710
    %1713 = vrot.lane.b32.xlu0 %v282, 72
    %v1714 = vpop.permute.xlu0 %1713
    %v1717 = vsel %vm292, %v1709, 0
    %1719 = vmatprep.subr.mxu0 0.0
    %1720 = vmatpush1.msra.mxu0 0.0
    %1721 = vmatprep.subr.mxu0 0.0
    %1722 = vmatpush1.msra.mxu0 0.0
    %1723 = vmatprep.subr.mxu0 0.0
    %1724 = vmatpush1.msra.mxu0 0.0
    %1725 = vmatprep.subr.mxu0 0.0
    %1726 = vmatpush1.msra.mxu0 0.0
    %1727 = vmatprep.subr.mxu0 0.0
    %1728 = vmatpush1.msra.mxu0 0.0
    %1729 = vmatprep.subr.mxu0 0.0
    %1730 = vmatpush1.msra.mxu0 0.0
    %1731 = vmatprep.subr.mxu0 0.0
    %1732 = vmatpush1.msra.mxu0 0.0
    %1733 = vmatprep.subr.mxu0 0.0
    %1734 = vmatpush1.msra.mxu0 0.0
    %1735 = vmatprep.subr.mxu0 0.0
    %1736 = vmatpush1.msra.mxu0 0.0
    %1737 = vmatprep.subr.mxu0 0.0
    %1738 = vmatpush1.msra.mxu0 0.0
    %1739 = vmatprep.subr.mxu0 0.0
    %1740 = vmatpush1.msra.mxu0 0.0
    %1741 = vmatprep.subr.mxu0 0.0
    %1742 = vmatpush1.msra.mxu0 0.0
    %1743 = vmatprep.subr.mxu0 0.0
    %1744 = vmatpush1.msra.mxu0 0.0
    %1745 = vmatprep.subr.mxu0 0.0
    %1746 = vmatpush1.msra.mxu0 0.0
    %1747 = vmatprep.subr.mxu0 0.0
    %1748 = vmatpush1.msra.mxu0 0.0
    %1749 = vmatprep.subr.mxu0 0.0
    %1750 = vmatpush1.msra.mxu0 %v1714
    %1751 = vmatprep.subr.mxu0 0.0
    %1752 = vmatpush2.msra.mxu0 0.0
    %1753 = vmatprep.subr.mxu0 0.0
    %1754 = vmatpush2.msra.mxu0 0.0
    %1755 = vmatprep.subr.mxu0 0.0
    %1756 = vmatpush2.msra.mxu0 0.0
    %1757 = vmatprep.subr.mxu0 0.0
    %1758 = vmatpush2.msra.mxu0 0.0
    %1759 = vmatprep.subr.mxu0 0.0
    %1760 = vmatpush2.msra.mxu0 0.0
    %1761 = vmatprep.subr.mxu0 0.0
    %1762 = vmatpush2.msra.mxu0 0.0
    %1763 = vmatprep.subr.mxu0 0.0
    %1764 = vmatpush2.msra.mxu0 0.0
    %1765 = vmatprep.subr.mxu0 0.0
    %1766 = vmatpush2.msra.mxu0 0.0
    %1767 = vmatprep.subr.mxu0 0.0
    %1768 = vmatpush2.msra.mxu0 0.0
    %1769 = vmatprep.subr.mxu0 0.0
    %1770 = vmatpush2.msra.mxu0 0.0
    %1771 = vmatprep.subr.mxu0 0.0
    %1772 = vmatpush2.msra.mxu0 0.0
    %1773 = vmatprep.subr.mxu0 0.0
    %1774 = vmatpush2.msra.mxu0 0.0
    %1775 = vmatprep.subr.mxu0 0.0
    %1776 = vmatpush2.msra.mxu0 0.0
    %1777 = vmatprep.subr.mxu0 0.0
    %1778 = vmatpush2.msra.mxu0 0.0
    %1779 = vmatprep.subr.mxu0 0.0
    %1780 = vmatpush2.msra.mxu0 0.0
    %1781 = vmatprep.subr.mxu0 0.0
    %1782 = vmatpush2.msra.mxu0 0.0
    %1783 = vmatprep.mubr.f32.mxu0 0.0
    %1784 = vmatmul.mubr.f32.gmra.mxu0 %v1717
    %v1785 = vpop.f32.mrf.mxu0
    %v1786 = vadd.f32 0.0, %v1785
    %v1787 = vpop.f32.mrf.mxu0
    %1788 = vdwg.mxu0
    %1789 = vrot.lane.b32.xlu0 %v287, 72
    %v1790 = vpop.permute.xlu0 %1789
    %v1793 = vsel %vm292, %v1710, 0
    %1795 = vmatprep.subr.mxu0 0.0
    %1796 = vmatpush1.msra.mxu0 0.0
    %1797 = vmatprep.subr.mxu0 0.0
    %1798 = vmatpush1.msra.mxu0 0.0
    %1799 = vmatprep.subr.mxu0 0.0
    %1800 = vmatpush1.msra.mxu0 0.0
    %1801 = vmatprep.subr.mxu0 0.0
    %1802 = vmatpush1.msra.mxu0 0.0
    %1803 = vmatprep.subr.mxu0 0.0
    %1804 = vmatpush1.msra.mxu0 0.0
    %1805 = vmatprep.subr.mxu0 0.0
    %1806 = vmatpush1.msra.mxu0 0.0
    %1807 = vmatprep.subr.mxu0 0.0
    %1808 = vmatpush1.msra.mxu0 0.0
    %1809 = vmatprep.subr.mxu0 0.0
    %1810 = vmatpush1.msra.mxu0 0.0
    %1811 = vmatprep.subr.mxu0 0.0
    %1812 = vmatpush1.msra.mxu0 0.0
    %1813 = vmatprep.subr.mxu0 0.0
    %1814 = vmatpush1.msra.mxu0 0.0
    %1815 = vmatprep.subr.mxu0 0.0
    %1816 = vmatpush1.msra.mxu0 0.0
    %1817 = vmatprep.subr.mxu0 0.0
    %1818 = vmatpush1.msra.mxu0 0.0
    %1819 = vmatprep.subr.mxu0 0.0
    %1820 = vmatpush1.msra.mxu0 0.0
    %1821 = vmatprep.subr.mxu0 0.0
    %1822 = vmatpush1.msra.mxu0 0.0
    %1823 = vmatprep.subr.mxu0 0.0
    %1824 = vmatpush1.msra.mxu0 0.0
    %1825 = vmatprep.subr.mxu0 0.0
    %1826 = vmatpush1.msra.mxu0 %v1790
    %1827 = vmatprep.subr.mxu0 0.0
    %1828 = vmatpush2.msra.mxu0 0.0
    %1829 = vmatprep.subr.mxu0 0.0
    %1830 = vmatpush2.msra.mxu0 0.0
    %1831 = vmatprep.subr.mxu0 0.0
    %1832 = vmatpush2.msra.mxu0 0.0
    %1833 = vmatprep.subr.mxu0 0.0
    %1834 = vmatpush2.msra.mxu0 0.0
    %1835 = vmatprep.subr.mxu0 0.0
    %1836 = vmatpush2.msra.mxu0 0.0
    %1837 = vmatprep.subr.mxu0 0.0
    %1838 = vmatpush2.msra.mxu0 0.0
    %1839 = vmatprep.subr.mxu0 0.0
    %1840 = vmatpush2.msra.mxu0 0.0
    %1841 = vmatprep.subr.mxu0 0.0
    %1842 = vmatpush2.msra.mxu0 0.0
    %1843 = vmatprep.subr.mxu0 0.0
    %1844 = vmatpush2.msra.mxu0 0.0
    %1845 = vmatprep.subr.mxu0 0.0
    %1846 = vmatpush2.msra.mxu0 0.0
    %1847 = vmatprep.subr.mxu0 0.0
    %1848 = vmatpush2.msra.mxu0 0.0
    %1849 = vmatprep.subr.mxu0 0.0
    %1850 = vmatpush2.msra.mxu0 0.0
    %1851 = vmatprep.subr.mxu0 0.0
    %1852 = vmatpush2.msra.mxu0 0.0
    %1853 = vmatprep.subr.mxu0 0.0
    %1854 = vmatpush2.msra.mxu0 0.0
    %1855 = vmatprep.subr.mxu0 0.0
    %1856 = vmatpush2.msra.mxu0 0.0
    %1857 = vmatprep.subr.mxu0 0.0
    %1858 = vmatpush2.msra.mxu0 0.0
    %1859 = vmatprep.mubr.f32.mxu0 0.0
    %1860 = vmatmul.mubr.f32.gmra.mxu0 %v1793
    %v1861 = vpop.f32.mrf.mxu0
    %v1862 = vadd.f32 0.0, %v1861
    %v1863 = vpop.f32.mrf.mxu0
    %1864 = vdwg.mxu0
    %v1865 = vld [vmem:[#allocation10 + $0x18] sm:$0xff]
    %v1867 = vsel %vm292, %v1786, 0
    %v1870 = vsel %vm292, %v1862, 0
    %1872 = vmatprep.subr.mxu0 0.0
    %1873 = vmatpush1.msra.mxu0 0.0
    %1874 = vmatprep.subr.mxu0 0.0
    %1875 = vmatpush1.msra.mxu0 0.0
    %1876 = vmatprep.subr.mxu0 0.0
    %1877 = vmatpush1.msra.mxu0 0.0
    %1878 = vmatprep.subr.mxu0 0.0
    %1879 = vmatpush1.msra.mxu0 0.0
    %1880 = vmatprep.subr.mxu0 0.0
    %1881 = vmatpush1.msra.mxu0 0.0
    %1882 = vmatprep.subr.mxu0 0.0
    %1883 = vmatpush1.msra.mxu0 0.0
    %1884 = vmatprep.subr.mxu0 0.0
    %1885 = vmatpush1.msra.mxu0 0.0
    %1886 = vmatprep.subr.mxu0 0.0
    %1887 = vmatpush1.msra.mxu0 0.0
    %1888 = vmatprep.subr.mxu0 0.0
    %1889 = vmatpush1.msra.mxu0 0.0
    %1890 = vmatprep.subr.mxu0 0.0
    %1891 = vmatpush1.msra.mxu0 0.0
    %1892 = vmatprep.subr.mxu0 0.0
    %1893 = vmatpush1.msra.mxu0 0.0
    %1894 = vmatprep.subr.mxu0 0.0
    %1895 = vmatpush1.msra.mxu0 0.0
    %1896 = vmatprep.subr.mxu0 0.0
    %1897 = vmatpush1.msra.mxu0 0.0
    %1898 = vmatprep.subr.mxu0 0.0
    %1899 = vmatpush1.msra.mxu0 0.0
    %1900 = vmatprep.subr.mxu0 0.0
    %1901 = vmatpush1.msra.mxu0 0.0
    %1902 = vmatprep.subr.mxu0 0.0
    %1903 = vmatpush1.msra.mxu0 %v1865
    %1904 = vmatprep.subr.mxu0 0.0
    %1905 = vmatpush2.msra.mxu0 0.0
    %1906 = vmatprep.subr.mxu0 0.0
    %1907 = vmatpush2.msra.mxu0 0.0
    %1908 = vmatprep.subr.mxu0 0.0
    %1909 = vmatpush2.msra.mxu0 0.0
    %1910 = vmatprep.subr.mxu0 0.0
    %1911 = vmatpush2.msra.mxu0 0.0
    %1912 = vmatprep.subr.mxu0 0.0
    %1913 = vmatpush2.msra.mxu0 0.0
    %1914 = vmatprep.subr.mxu0 0.0
    %1915 = vmatpush2.msra.mxu0 0.0
    %1916 = vmatprep.subr.mxu0 0.0
    %1917 = vmatpush2.msra.mxu0 0.0
    %1918 = vmatprep.subr.mxu0 0.0
    %1919 = vmatpush2.msra.mxu0 0.0
    %1920 = vmatprep.subr.mxu0 0.0
    %1921 = vmatpush2.msra.mxu0 0.0
    %1922 = vmatprep.subr.mxu0 0.0
    %1923 = vmatpush2.msra.mxu0 0.0
    %1924 = vmatprep.subr.mxu0 0.0
    %1925 = vmatpush2.msra.mxu0 0.0
    %1926 = vmatprep.subr.mxu0 0.0
    %1927 = vmatpush2.msra.mxu0 0.0
    %1928 = vmatprep.subr.mxu0 0.0
    %1929 = vmatpush2.msra.mxu0 0.0
    %1930 = vmatprep.subr.mxu0 0.0
    %1931 = vmatpush2.msra.mxu0 0.0
    %1932 = vmatprep.subr.mxu0 0.0
    %1933 = vmatpush2.msra.mxu0 0.0
    %1934 = vmatprep.subr.mxu0 0.0
    %1935 = vmatpush2.msra.mxu0 0.0
    %1936 = vmatprep.mubr.f32.mxu0 0.0
    %1937 = vmatmul.mubr.f32.gmra.mxu0 %v1867
    %v1938 = vpop.f32.mrf.mxu0
    %v1939 = vadd.f32 0.0, %v1938
    %v1940 = vpop.f32.mrf.mxu0
    %1941 = vmatprep.mubr.f32.mxu0 0.0
    %1942 = vmatmul.mubr.f32.gmra.mxu0 %v1870
    %v1943 = vpop.f32.mrf.mxu0
    %v1944 = vadd.f32 0.0, %v1943
    %v1945 = vpop.f32.mrf.mxu0
    %1946 = vdwg.mxu0
    %v1947 = vadd.f32 %v1531, %v1939
    %v1948 = vadd.f32 %v1532, %v1944
    %v1949 = vld [vmem:[%s7] sm:$0x1]
    %v1951 = vlaneseq
    %v1952 = vshrl.u32 %v1951, 7
    %v1953 = vsub.s32 0, %v1952
    %v1954 = vrot.slane %v1949, %v1953
    %v1956 = vadd.f32 %v1947, %v1954
    %v1957 = vadd.f32 %v1948, %v1954
    %1958 = vst.msk [vmem:[#allocation11] sm:$0xff] %vm116, %v1956
    %1959 = vst.msk [vmem:[#allocation11 + $0x8] sm:$0xff] %vm116, %v1957
    %v1960 = vmul.f32 %v1711, 0.25
    %v1961 = vmul.f32 %v1712, 0.25
    %1962 = vst.msk [vmem:[#allocation12] sm:$0xff] %vm292, %v1960
    %1963 = vst.msk [vmem:[#allocation12 + $0x8] sm:$0xff] %vm292, %v1961
    // Predicated region
    $region54: #{tpu_custom_call.1} parent=1 // pred_check
      _
    $region55: #{tpu_custom_call.1} parent=1 // pred_check_branch
      %1965 = sbr.rel (0) target = $region57
    $region56: #{tpu_custom_call.1} parent=1 // pred_region
      %s1967 = ssub.s32 256, 256
      %1968 = vsyncadd [#allocation4], %s1967
      %s1969 = sshll.u32 [#allocation11], 4
      %s1970 = int_to_ptr.vmem [resolvable:$true] %s1969
      %1975 = dma.vmem_to_hbm [thread:$0]  %s1970, 256, %s8, [#allocation4], 128, 128, 8
    $region57: #{tpu_custom_call.1} parent=1 // pred_fallthru
      _
    // Predicated region
    $region58: #{tpu_custom_call.1} parent=1 // pred_check
      _
    $region59: #{tpu_custom_call.1} parent=1 // pred_check_branch
      %1977 = sbr.rel (0) target = $region61
    $region60: #{tpu_custom_call.1} parent=1 // pred_region
      %s1979 = ssub.s32 256, 256
      %1980 = vsyncadd [#allocation13], %s1979
      %s1981 = sshll.u32 [#allocation12], 4
      %s1982 = int_to_ptr.vmem [resolvable:$true] %s1981
      %1987 = dma.vmem_to_hbm [thread:$0]  %s1982, 256, %s9, [#allocation13], 128, 128, 8
    $region61: #{tpu_custom_call.1} parent=1 // pred_fallthru
      _
    // Predicated region
    $region62: #{tpu_custom_call.1} parent=1 // pred_check
      _
    $region63: #{tpu_custom_call.1} parent=1 // pred_check_branch
      %1989 = sbr.rel (0) target = $region65
    $region64: #{tpu_custom_call.1} parent=1 // pred_region
      %1990 = dma.done [#allocation4], 256
    $region65: #{tpu_custom_call.1} parent=1 // pred_fallthru
      _
    // Predicated region
    $region66: #{tpu_custom_call.1} parent=1 // pred_check
      _
    $region67: #{tpu_custom_call.1} parent=1 // pred_check_branch
      %1992 = sbr.rel (0) target = $region69
    $region68: #{tpu_custom_call.1} parent=1 // pred_region
      %1993 = dma.done [#allocation13], 256
    $region69: #{tpu_custom_call.1} parent=1 // pred_fallthru
      _
    %1994 = vsyncpa [#allocation3], 1
    %1995 = vsyncpa [#allocation6], 1
    %1996 = vsyncpa [#allocation9], 1
    %1997 = vsyncpa [#allocation4], 1
    %1998 = vsyncpa [#allocation13], 1

</llo_original>
